<compile_context>
chip_gen: v7x
topology: tpu7x:2x2x1
jax: 0.10.0
libtpu: 0.0.40
codegen_flags: <defaults>
</compile_context>

<pallas_src>
import functools

import jax
import jax.numpy as jnp
from jax.experimental import pallas as pl
from jax.experimental.pallas import tpu as pltpu


_ACTIVATIONS = {
    "relu": jax.nn.relu,
    "tanh": jnp.tanh,
    "elu": jax.nn.elu,
    "selu": jax.nn.selu,
    "leaky_relu": lambda x: jax.nn.leaky_relu(x, 0.01),
    "sigmoid": jax.nn.sigmoid,
}


# ---------------------------------------------------------------------------
# Fused kernel: all LSTM layers + activation + dense head, one grid step per
# independent sequence.
# ---------------------------------------------------------------------------
def _fused_lstm_kernel(num_layers, hidden_dim, act_fn, *refs):
    H = hidden_dim
    x_ref = refs[0]
    w_out_ref = refs[1 + 3 * num_layers]
    b_out_ref = refs[2 + 3 * num_layers]
    o_ref = refs[3 + 3 * num_layers]

    S = x_ref.shape[0]
    seq = x_ref[...].astype(jnp.float32)        # (S, d_in) current layer input

    for l in range(num_layers):
        wih_ref, whh_ref, b_ref = refs[1 + 3 * l: 4 + 3 * l]

        # Hoisted input projection for ALL timesteps: one bf16 MXU matmul,
        # off the recurrent dependency chain.
        gates_all = (
            jnp.dot(seq.astype(jnp.bfloat16), wih_ref[...],
                    preferred_element_type=jnp.float32)
            + b_ref[...]
        )                                        # (S, 4H) f32
        whh = whh_ref[...]                       # (H, 4H) bf16

        # Hoist the sublane row extracts ahead of the serial loop so they can
        # run ahead of / overlap the h-dependent matmuls.
        gate_rows = [gates_all[t:t + 1, :] for t in range(S)]

        h = jnp.zeros((1, H), jnp.float32)
        c = jnp.zeros((1, H), jnp.float32)
        hs = []
        # Statically unrolled time loop (S is small & static) -> full LLO
        # scheduler visibility, zero grid / loop bookkeeping on the serial path.
        for t in range(S):
            gates = gate_rows[t] + jnp.dot(
                h.astype(jnp.bfloat16), whh,
                preferred_element_type=jnp.float32)          # (1, 4H) f32
            # Single EUP push on the full 128-lane vreg; the g-gate pre-
            # activation was pre-scaled by 2 on the host so tanh is recovered
            # via tanh(x) = 2*sigmoid(2x) - 1 with one VALU fma.
            sig = jax.nn.sigmoid(gates)
            i_g = sig[:, 0:H]                    # PyTorch gate order: i, f, g, o
            f_g = sig[:, H:2 * H]
            g_g = 2.0 * sig[:, 2 * H:3 * H] - 1.0
            o_g = sig[:, 3 * H:4 * H]
            c = f_g * c + i_g * g_g
            h = o_g * jnp.tanh(c)
            hs.append(h)                         # register-resident, no masked stores

        seq = jnp.concatenate(hs, axis=0)        # (S, H): input to next layer

    # Head: activation + dense projection, single matmul, single HBM writeback.
    act = act_fn(seq)                            # == act(lstm_out.view(S, -1)) for B==1
    o_ref[...] = (
        jnp.dot(act.astype(jnp.bfloat16), w_out_ref[...],
                preferred_element_type=jnp.float32)
        + b_out_ref[...]
    ).astype(o_ref.dtype)


# ---------------------------------------------------------------------------
# One-time host-side parameter preparation (hoisted off the per-call path).
# ---------------------------------------------------------------------------
def prepare_params(layer_params, w_out, b_out):
    """Transpose, fuse biases, fold the tanh-via-sigmoid 2x scale into the
    g-gate columns, and cast matmul weights to bf16.  Call once."""
    H = layer_params[0][1].shape[1]              # w_hh: (4H, H)
    prep = []
    for (w_ih, w_hh, b_ih, b_hh) in layer_params:
        scale = jnp.ones((1, 4 * H), jnp.float32).at[:, 2 * H:3 * H].set(2.0)
        wih_t = jnp.asarray(w_ih, jnp.float32).T * scale        # (d_in, 4H)
        whh_t = jnp.asarray(w_hh, jnp.float32).T * scale        # (H, 4H)
        b = (jnp.asarray(b_ih, jnp.float32)
             + jnp.asarray(b_hh, jnp.float32)).reshape(1, 4 * H) * scale
        prep += [wih_t.astype(jnp.bfloat16),
                 whh_t.astype(jnp.bfloat16),
                 b.astype(jnp.float32)]
    C = w_out.shape[0]
    prep += [jnp.asarray(w_out, jnp.float32).T.astype(jnp.bfloat16),   # (H, C)
             jnp.asarray(b_out, jnp.float32).reshape(1, C)]
    return tuple(prep)


# ---------------------------------------------------------------------------
# Batched forward over N independent sequences (grid axis, "parallel").
# ---------------------------------------------------------------------------
def lstm_forward_batched(xs, prep, activation_fun):
    """xs: (N, S, I) -> logits (N, S, num_classes).  Each sequence is an
    independent forward of the PyTorch module with batch_size == 1."""
    N, S, I = xs.shape
    num_layers = (len(prep) - 2) // 3
    H = prep[1].shape[0]                         # whh_t: (H, 4H)
    C = prep[-1].shape[1]

    in_specs = [pl.BlockSpec((None, S, I), lambda n: (n, 0, 0))]
    for l in range(num_layers):
        d_in = prep[3 * l].shape[0]
        in_specs += [
            pl.BlockSpec((d_in, 4 * H), lambda n: (0, 0)),   # weights: constant
            pl.BlockSpec((H, 4 * H), lambda n: (0, 0)),      # index_maps -> stay
            pl.BlockSpec((1, 4 * H), lambda n: (0, 0)),      # VMEM-resident
        ]
    in_specs += [
        pl.BlockSpec((H, C), lambda n: (0, 0)),
        pl.BlockSpec((1, C), lambda n: (0, 0)),
    ]

    kernel = functools.partial(
        _fused_lstm_kernel, num_layers, H, _ACTIVATIONS[activation_fun])

    return pl.pallas_call(
        kernel,
        out_shape=jax.ShapeDtypeStruct((N, S, C), xs.dtype),
        grid_spec=pltpu.PrefetchScalarGridSpec(
            num_scalar_prefetch=0,
            grid=(N,),                           # one grid step per sequence
            in_specs=in_specs,
            out_specs=pl.BlockSpec((None, S, C), lambda n: (n, 0, 0)),
        ),
        compiler_params=pltpu.CompilerParams(
            dimension_semantics=("parallel",)),  # v7x: shard sequences over TCs
    )(xs, *prep)


def lstm_forward(x, prep, activation_fun):
    """Module-parity forward: x (S, B=1, I) -> logits (S, num_classes)."""
    S, B, I = x.shape
    assert B == 1, "module's view()+Linear head only works for batch_size == 1"
    return lstm_forward_batched(x.reshape(1, S, I), prep, activation_fun)[0]


# ---------------------------------------------------------------------------
# Pure-JAX f32 reference (PyTorch semantics) for verification.
# ---------------------------------------------------------------------------
def lstm_forward_ref(x, layer_params, w_out, b_out, activation_fun):
    y = x
    for (w_ih, w_hh, b_ih, b_hh) in layer_params:
        B = y.shape[1]
        H = w_hh.shape[1]

        def step(carry, x_t):
            h, c = carry
            gates = x_t @ w_ih.T + b_ih + h @ w_hh.T + b_hh
            i, f, g, o = jnp.split(gates, 4, axis=-1)
            c = jax.nn.sigmoid(f) * c + jax.nn.sigmoid(i) * jnp.tanh(g)
            h = jax.nn.sigmoid(o) * jnp.tanh(c)
            return (h, c), h

        init = (jnp.zeros((B, H), jnp.float32), jnp.zeros((B, H), jnp.float32))
        _, y = jax.lax.scan(step, init, y)
    out = _ACTIVATIONS[activation_fun](y.reshape(y.shape[0], -1))
    return out @ w_out.T + b_out


if __name__ == "__main__":
    # opts implied by the PyTorch module
    opts = dict(
        input_size=16,
        hidden_dim=32,
        num_layers=2,
        dropout=0.0,          # TODO(synk): training-mode inter-layer dropout not implemented (eval-equivalent)
        batch_first=False,
        bidirectional=False,  # TODO(synk): bidirectional variant not implemented
        num_classes=5,
        batch_size=1,         # the module's view()+Linear only works for B==1
        activation_fun="tanh",
    )
    S, N = 8, 2               # sequence length, independent sequences (grid axis)
    I, H, C = opts["input_size"], opts["hidden_dim"], opts["num_classes"]
    L = opts["num_layers"]

    key = jax.random.PRNGKey(0)
    keys = jax.random.split(key, 4 * L + 3)

    # Deterministic parameter init (uniform(-1/sqrt(H), 1/sqrt(H)), like PyTorch).
    k = 1.0 / jnp.sqrt(H)
    layer_params = []
    for l in range(L):
        d_in = I if l == 0 else H
        w_ih = jax.random.uniform(keys[4 * l + 0], (4 * H, d_in), jnp.float32, -k, k)
        w_hh = jax.random.uniform(keys[4 * l + 1], (4 * H, H), jnp.float32, -k, k)
        b_ih = jax.random.uniform(keys[4 * l + 2], (4 * H,), jnp.float32, -k, k)
        b_hh = jax.random.uniform(keys[4 * l + 3], (4 * H,), jnp.float32, -k, k)
        layer_params.append((w_ih, w_hh, b_ih, b_hh))

    w_out = jax.random.uniform(keys[-3], (C, H), jnp.float32, -k, k)
    b_out = jax.random.uniform(keys[-2], (C,), jnp.float32, -k, k)

    # One-time parameter prep (transpose / bias-fuse / gate-rescale / bf16 cast).
    prep = prepare_params(layer_params, w_out, b_out)

    # Independent sequences, each time-major (seq, input_size) with batch 1.
    xs = jax.random.normal(keys[-1], (N, S, I), jnp.float32)

    logits = lstm_forward_batched(xs, prep, opts["activation_fun"])
    logits = jax.block_until_ready(logits)
    assert logits.shape == (N, S, C), logits.shape

    # Verify each sequence against the pure-f32 JAX reference.  Tolerance is
    # relaxed to ~2e-2 because the kernel feeds the MXU bf16 operands.
    for n in range(N):
        ref = lstm_forward_ref(xs[n][:, None, :], layer_params, w_out, b_out,
                               opts["activation_fun"])
        err = float(jnp.max(jnp.abs(logits[n] - ref)))
        assert jnp.allclose(logits[n], ref, rtol=2e-2, atol=2e-2), err

    # Module-parity single-sequence entry point (batch_size == 1).
    single = lstm_forward(xs[0][:, None, :], prep, opts["activation_fun"])
    single = jax.block_until_ready(single)
    assert single.shape == (S, C), single.shape
    assert jnp.allclose(single, logits[0], rtol=1e-5, atol=1e-5)

    print("KERNEL_OK")
</pallas_src>

<mosaic_0001>
module attributes {stable_mosaic.version = 11 : i64} {
  func.func @_fused_lstm_kernel(%arg0: i32, %arg1: memref<1x8x16xf32, #tpu.memory_space<vmem>>, %arg2: memref<16x128xbf16, #tpu.memory_space<vmem>>, %arg3: memref<32x128xbf16, #tpu.memory_space<vmem>>, %arg4: memref<1x128xf32, #tpu.memory_space<vmem>>, %arg5: memref<32x128xbf16, #tpu.memory_space<vmem>>, %arg6: memref<32x128xbf16, #tpu.memory_space<vmem>>, %arg7: memref<1x128xf32, #tpu.memory_space<vmem>>, %arg8: memref<32x5xbf16, #tpu.memory_space<vmem>>, %arg9: memref<1x5xf32, #tpu.memory_space<vmem>>, %arg10: memref<1x8x5xf32, #tpu.memory_space<vmem>>) attributes {dimension_semantics = [#tpu.dimension_semantics<parallel>], iteration_bounds = array<i64: 2>, scalar_prefetch = 0 : i64, scratch_operands = 0 : i64, tpu.core_type = #tpu.core_type<tc>, window_params = [{transform_indices = @transform_0, window_bounds = array<i64: 1, 8, 16>}, {pipeline_mode = #tpu.pipeline_mode<synchronous>, transform_indices = @transform_1, window_bounds = array<i64: 16, 128>}, {pipeline_mode = #tpu.pipeline_mode<synchronous>, transform_indices = @transform_2, window_bounds = array<i64: 32, 128>}, {pipeline_mode = #tpu.pipeline_mode<synchronous>, transform_indices = @transform_3, window_bounds = array<i64: 1, 128>}, {pipeline_mode = #tpu.pipeline_mode<synchronous>, transform_indices = @transform_4, window_bounds = array<i64: 32, 128>}, {pipeline_mode = #tpu.pipeline_mode<synchronous>, transform_indices = @transform_5, window_bounds = array<i64: 32, 128>}, {pipeline_mode = #tpu.pipeline_mode<synchronous>, transform_indices = @transform_6, window_bounds = array<i64: 1, 128>}, {pipeline_mode = #tpu.pipeline_mode<synchronous>, transform_indices = @transform_7, window_bounds = array<i64: 32, 5>}, {pipeline_mode = #tpu.pipeline_mode<synchronous>, transform_indices = @transform_8, window_bounds = array<i64: 1, 5>}, {transform_indices = @transform_9, window_bounds = array<i64: 1, 8, 5>}]} {
    %c0 = arith.constant 0 : index
    %c0_0 = arith.constant 0 : index
    %c0_1 = arith.constant 0 : index
    %0 = vector.load %arg1[%c0, %c0_0, %c0_1] : memref<1x8x16xf32, #tpu.memory_space<vmem>>, vector<1x8x16xf32>
    %1 = vector.shape_cast %0 : vector<1x8x16xf32> to vector<8x16xf32>
    %2 = arith.truncf %1 : vector<8x16xf32> to vector<8x16xbf16>
    %c0_2 = arith.constant 0 : index
    %c0_3 = arith.constant 0 : index
    %3 = vector.load %arg2[%c0_2, %c0_3] : memref<16x128xbf16, #tpu.memory_space<vmem>>, vector<16x128xbf16>
    %cst = arith.constant dense<0.000000e+00> : vector<8x128xf32>
    %4 = tpu.matmul %2, %3, %cst {dimension_numbers = #tpu.dot_dimension_numbers<[1], [0], [0], [1], [0, 0, 1, 1], [], []>} : vector<8x16xbf16>, vector<16x128xbf16>, vector<8x128xf32> -> vector<8x128xf32>
    %c0_4 = arith.constant 0 : index
    %c0_5 = arith.constant 0 : index
    %5 = vector.load %arg4[%c0_4, %c0_5] : memref<1x128xf32, #tpu.memory_space<vmem>>, vector<1x128xf32>
    %6 = vector.broadcast %5 : vector<1x128xf32> to vector<8x128xf32>
    %7 = arith.addf %4, %6 : vector<8x128xf32>
    %c0_6 = arith.constant 0 : index
    %c0_7 = arith.constant 0 : index
    %8 = vector.load %arg3[%c0_6, %c0_7] : memref<32x128xbf16, #tpu.memory_space<vmem>>, vector<32x128xbf16>
    %9 = vector.extract_strided_slice %7 {offsets = [0, 0], sizes = [1, 128], strides = [1, 1]} : vector<8x128xf32> to vector<1x128xf32>
    %10 = vector.extract_strided_slice %7 {offsets = [1, 0], sizes = [1, 128], strides = [1, 1]} : vector<8x128xf32> to vector<1x128xf32>
    %11 = vector.extract_strided_slice %7 {offsets = [2, 0], sizes = [1, 128], strides = [1, 1]} : vector<8x128xf32> to vector<1x128xf32>
    %12 = vector.extract_strided_slice %7 {offsets = [3, 0], sizes = [1, 128], strides = [1, 1]} : vector<8x128xf32> to vector<1x128xf32>
    %13 = vector.extract_strided_slice %7 {offsets = [4, 0], sizes = [1, 128], strides = [1, 1]} : vector<8x128xf32> to vector<1x128xf32>
    %14 = vector.extract_strided_slice %7 {offsets = [5, 0], sizes = [1, 128], strides = [1, 1]} : vector<8x128xf32> to vector<1x128xf32>
    %15 = vector.extract_strided_slice %7 {offsets = [6, 0], sizes = [1, 128], strides = [1, 1]} : vector<8x128xf32> to vector<1x128xf32>
    %16 = vector.extract_strided_slice %7 {offsets = [7, 0], sizes = [1, 128], strides = [1, 1]} : vector<8x128xf32> to vector<1x128xf32>
    %cst_8 = arith.constant 0.000000e+00 : f32
    %17 = vector.broadcast %cst_8 : f32 to vector<1x32xf32>
    %cst_9 = arith.constant 0.000000e+00 : f32
    %18 = vector.broadcast %cst_9 : f32 to vector<1x32xf32>
    %19 = arith.truncf %17 : vector<1x32xf32> to vector<1x32xbf16>
    %cst_10 = arith.constant dense<0.000000e+00> : vector<1x128xf32>
    %20 = tpu.matmul %19, %8, %cst_10 {dimension_numbers = #tpu.dot_dimension_numbers<[1], [0], [0], [1], [0, 0, 1, 1], [], []>} : vector<1x32xbf16>, vector<32x128xbf16>, vector<1x128xf32> -> vector<1x128xf32>
    %21 = arith.addf %9, %20 : vector<1x128xf32>
    %22 = arith.negf %21 : vector<1x128xf32>
    %23 = math.exp %22 : vector<1x128xf32>
    %cst_11 = arith.constant 1.000000e+00 : f32
    %24 = vector.broadcast %cst_11 : f32 to vector<1x128xf32>
    %25 = arith.addf %24, %23 : vector<1x128xf32>
    %26 = arith.divf %24, %25 : vector<1x128xf32>
    %27 = vector.extract_strided_slice %26 {offsets = [0, 0], sizes = [1, 32], strides = [1, 1]} : vector<1x128xf32> to vector<1x32xf32>
    %28 = vector.extract_strided_slice %26 {offsets = [0, 32], sizes = [1, 32], strides = [1, 1]} : vector<1x128xf32> to vector<1x32xf32>
    %29 = vector.extract_strided_slice %26 {offsets = [0, 64], sizes = [1, 32], strides = [1, 1]} : vector<1x128xf32> to vector<1x32xf32>
    %cst_12 = arith.constant 2.000000e+00 : f32
    %30 = vector.broadcast %cst_12 : f32 to vector<1x32xf32>
    %31 = arith.mulf %30, %29 : vector<1x32xf32>
    %cst_13 = arith.constant 1.000000e+00 : f32
    %32 = vector.broadcast %cst_13 : f32 to vector<1x32xf32>
    %33 = arith.subf %31, %32 : vector<1x32xf32>
    %34 = vector.extract_strided_slice %26 {offsets = [0, 96], sizes = [1, 32], strides = [1, 1]} : vector<1x128xf32> to vector<1x32xf32>
    %35 = arith.mulf %28, %18 : vector<1x32xf32>
    %36 = arith.mulf %27, %33 : vector<1x32xf32>
    %37 = arith.addf %35, %36 : vector<1x32xf32>
    %38 = math.tanh %37 : vector<1x32xf32>
    %39 = arith.mulf %34, %38 : vector<1x32xf32>
    %40 = arith.truncf %39 : vector<1x32xf32> to vector<1x32xbf16>
    %cst_14 = arith.constant dense<0.000000e+00> : vector<1x128xf32>
    %41 = tpu.matmul %40, %8, %cst_14 {dimension_numbers = #tpu.dot_dimension_numbers<[1], [0], [0], [1], [0, 0, 1, 1], [], []>} : vector<1x32xbf16>, vector<32x128xbf16>, vector<1x128xf32> -> vector<1x128xf32>
    %42 = arith.addf %10, %41 : vector<1x128xf32>
    %43 = arith.negf %42 : vector<1x128xf32>
    %44 = math.exp %43 : vector<1x128xf32>
    %cst_15 = arith.constant 1.000000e+00 : f32
    %45 = vector.broadcast %cst_15 : f32 to vector<1x128xf32>
    %46 = arith.addf %45, %44 : vector<1x128xf32>
    %47 = arith.divf %45, %46 : vector<1x128xf32>
    %48 = vector.extract_strided_slice %47 {offsets = [0, 0], sizes = [1, 32], strides = [1, 1]} : vector<1x128xf32> to vector<1x32xf32>
    %49 = vector.extract_strided_slice %47 {offsets = [0, 32], sizes = [1, 32], strides = [1, 1]} : vector<1x128xf32> to vector<1x32xf32>
    %50 = vector.extract_strided_slice %47 {offsets = [0, 64], sizes = [1, 32], strides = [1, 1]} : vector<1x128xf32> to vector<1x32xf32>
    %cst_16 = arith.constant 2.000000e+00 : f32
    %51 = vector.broadcast %cst_16 : f32 to vector<1x32xf32>
    %52 = arith.mulf %51, %50 : vector<1x32xf32>
    %cst_17 = arith.constant 1.000000e+00 : f32
    %53 = vector.broadcast %cst_17 : f32 to vector<1x32xf32>
    %54 = arith.subf %52, %53 : vector<1x32xf32>
    %55 = vector.extract_strided_slice %47 {offsets = [0, 96], sizes = [1, 32], strides = [1, 1]} : vector<1x128xf32> to vector<1x32xf32>
    %56 = arith.mulf %49, %37 : vector<1x32xf32>
    %57 = arith.mulf %48, %54 : vector<1x32xf32>
    %58 = arith.addf %56, %57 : vector<1x32xf32>
    %59 = math.tanh %58 : vector<1x32xf32>
    %60 = arith.mulf %55, %59 : vector<1x32xf32>
    %61 = arith.truncf %60 : vector<1x32xf32> to vector<1x32xbf16>
    %cst_18 = arith.constant dense<0.000000e+00> : vector<1x128xf32>
    %62 = tpu.matmul %61, %8, %cst_18 {dimension_numbers = #tpu.dot_dimension_numbers<[1], [0], [0], [1], [0, 0, 1, 1], [], []>} : vector<1x32xbf16>, vector<32x128xbf16>, vector<1x128xf32> -> vector<1x128xf32>
    %63 = arith.addf %11, %62 : vector<1x128xf32>
    %64 = arith.negf %63 : vector<1x128xf32>
    %65 = math.exp %64 : vector<1x128xf32>
    %cst_19 = arith.constant 1.000000e+00 : f32
    %66 = vector.broadcast %cst_19 : f32 to vector<1x128xf32>
    %67 = arith.addf %66, %65 : vector<1x128xf32>
    %68 = arith.divf %66, %67 : vector<1x128xf32>
    %69 = vector.extract_strided_slice %68 {offsets = [0, 0], sizes = [1, 32], strides = [1, 1]} : vector<1x128xf32> to vector<1x32xf32>
    %70 = vector.extract_strided_slice %68 {offsets = [0, 32], sizes = [1, 32], strides = [1, 1]} : vector<1x128xf32> to vector<1x32xf32>
    %71 = vector.extract_strided_slice %68 {offsets = [0, 64], sizes = [1, 32], strides = [1, 1]} : vector<1x128xf32> to vector<1x32xf32>
    %cst_20 = arith.constant 2.000000e+00 : f32
    %72 = vector.broadcast %cst_20 : f32 to vector<1x32xf32>
    %73 = arith.mulf %72, %71 : vector<1x32xf32>
    %cst_21 = arith.constant 1.000000e+00 : f32
    %74 = vector.broadcast %cst_21 : f32 to vector<1x32xf32>
    %75 = arith.subf %73, %74 : vector<1x32xf32>
    %76 = vector.extract_strided_slice %68 {offsets = [0, 96], sizes = [1, 32], strides = [1, 1]} : vector<1x128xf32> to vector<1x32xf32>
    %77 = arith.mulf %70, %58 : vector<1x32xf32>
    %78 = arith.mulf %69, %75 : vector<1x32xf32>
    %79 = arith.addf %77, %78 : vector<1x32xf32>
    %80 = math.tanh %79 : vector<1x32xf32>
    %81 = arith.mulf %76, %80 : vector<1x32xf32>
    %82 = arith.truncf %81 : vector<1x32xf32> to vector<1x32xbf16>
    %cst_22 = arith.constant dense<0.000000e+00> : vector<1x128xf32>
    %83 = tpu.matmul %82, %8, %cst_22 {dimension_numbers = #tpu.dot_dimension_numbers<[1], [0], [0], [1], [0, 0, 1, 1], [], []>} : vector<1x32xbf16>, vector<32x128xbf16>, vector<1x128xf32> -> vector<1x128xf32>
    %84 = arith.addf %12, %83 : vector<1x128xf32>
    %85 = arith.negf %84 : vector<1x128xf32>
    %86 = math.exp %85 : vector<1x128xf32>
    %cst_23 = arith.constant 1.000000e+00 : f32
    %87 = vector.broadcast %cst_23 : f32 to vector<1x128xf32>
    %88 = arith.addf %87, %86 : vector<1x128xf32>
    %89 = arith.divf %87, %88 : vector<1x128xf32>
    %90 = vector.extract_strided_slice %89 {offsets = [0, 0], sizes = [1, 32], strides = [1, 1]} : vector<1x128xf32> to vector<1x32xf32>
    %91 = vector.extract_strided_slice %89 {offsets = [0, 32], sizes = [1, 32], strides = [1, 1]} : vector<1x128xf32> to vector<1x32xf32>
    %92 = vector.extract_strided_slice %89 {offsets = [0, 64], sizes = [1, 32], strides = [1, 1]} : vector<1x128xf32> to vector<1x32xf32>
    %cst_24 = arith.constant 2.000000e+00 : f32
    %93 = vector.broadcast %cst_24 : f32 to vector<1x32xf32>
    %94 = arith.mulf %93, %92 : vector<1x32xf32>
    %cst_25 = arith.constant 1.000000e+00 : f32
    %95 = vector.broadcast %cst_25 : f32 to vector<1x32xf32>
    %96 = arith.subf %94, %95 : vector<1x32xf32>
    %97 = vector.extract_strided_slice %89 {offsets = [0, 96], sizes = [1, 32], strides = [1, 1]} : vector<1x128xf32> to vector<1x32xf32>
    %98 = arith.mulf %91, %79 : vector<1x32xf32>
    %99 = arith.mulf %90, %96 : vector<1x32xf32>
    %100 = arith.addf %98, %99 : vector<1x32xf32>
    %101 = math.tanh %100 : vector<1x32xf32>
    %102 = arith.mulf %97, %101 : vector<1x32xf32>
    %103 = arith.truncf %102 : vector<1x32xf32> to vector<1x32xbf16>
    %cst_26 = arith.constant dense<0.000000e+00> : vector<1x128xf32>
    %104 = tpu.matmul %103, %8, %cst_26 {dimension_numbers = #tpu.dot_dimension_numbers<[1], [0], [0], [1], [0, 0, 1, 1], [], []>} : vector<1x32xbf16>, vector<32x128xbf16>, vector<1x128xf32> -> vector<1x128xf32>
    %105 = arith.addf %13, %104 : vector<1x128xf32>
    %106 = arith.negf %105 : vector<1x128xf32>
    %107 = math.exp %106 : vector<1x128xf32>
    %cst_27 = arith.constant 1.000000e+00 : f32
    %108 = vector.broadcast %cst_27 : f32 to vector<1x128xf32>
    %109 = arith.addf %108, %107 : vector<1x128xf32>
    %110 = arith.divf %108, %109 : vector<1x128xf32>
    %111 = vector.extract_strided_slice %110 {offsets = [0, 0], sizes = [1, 32], strides = [1, 1]} : vector<1x128xf32> to vector<1x32xf32>
    %112 = vector.extract_strided_slice %110 {offsets = [0, 32], sizes = [1, 32], strides = [1, 1]} : vector<1x128xf32> to vector<1x32xf32>
    %113 = vector.extract_strided_slice %110 {offsets = [0, 64], sizes = [1, 32], strides = [1, 1]} : vector<1x128xf32> to vector<1x32xf32>
    %cst_28 = arith.constant 2.000000e+00 : f32
    %114 = vector.broadcast %cst_28 : f32 to vector<1x32xf32>
    %115 = arith.mulf %114, %113 : vector<1x32xf32>
    %cst_29 = arith.constant 1.000000e+00 : f32
    %116 = vector.broadcast %cst_29 : f32 to vector<1x32xf32>
    %117 = arith.subf %115, %116 : vector<1x32xf32>
    %118 = vector.extract_strided_slice %110 {offsets = [0, 96], sizes = [1, 32], strides = [1, 1]} : vector<1x128xf32> to vector<1x32xf32>
    %119 = arith.mulf %112, %100 : vector<1x32xf32>
    %120 = arith.mulf %111, %117 : vector<1x32xf32>
    %121 = arith.addf %119, %120 : vector<1x32xf32>
    %122 = math.tanh %121 : vector<1x32xf32>
    %123 = arith.mulf %118, %122 : vector<1x32xf32>
    %124 = arith.truncf %123 : vector<1x32xf32> to vector<1x32xbf16>
    %cst_30 = arith.constant dense<0.000000e+00> : vector<1x128xf32>
    %125 = tpu.matmul %124, %8, %cst_30 {dimension_numbers = #tpu.dot_dimension_numbers<[1], [0], [0], [1], [0, 0, 1, 1], [], []>} : vector<1x32xbf16>, vector<32x128xbf16>, vector<1x128xf32> -> vector<1x128xf32>
    %126 = arith.addf %14, %125 : vector<1x128xf32>
    %127 = arith.negf %126 : vector<1x128xf32>
    %128 = math.exp %127 : vector<1x128xf32>
    %cst_31 = arith.constant 1.000000e+00 : f32
    %129 = vector.broadcast %cst_31 : f32 to vector<1x128xf32>
    %130 = arith.addf %129, %128 : vector<1x128xf32>
    %131 = arith.divf %129, %130 : vector<1x128xf32>
    %132 = vector.extract_strided_slice %131 {offsets = [0, 0], sizes = [1, 32], strides = [1, 1]} : vector<1x128xf32> to vector<1x32xf32>
    %133 = vector.extract_strided_slice %131 {offsets = [0, 32], sizes = [1, 32], strides = [1, 1]} : vector<1x128xf32> to vector<1x32xf32>
    %134 = vector.extract_strided_slice %131 {offsets = [0, 64], sizes = [1, 32], strides = [1, 1]} : vector<1x128xf32> to vector<1x32xf32>
    %cst_32 = arith.constant 2.000000e+00 : f32
    %135 = vector.broadcast %cst_32 : f32 to vector<1x32xf32>
    %136 = arith.mulf %135, %134 : vector<1x32xf32>
    %cst_33 = arith.constant 1.000000e+00 : f32
    %137 = vector.broadcast %cst_33 : f32 to vector<1x32xf32>
    %138 = arith.subf %136, %137 : vector<1x32xf32>
    %139 = vector.extract_strided_slice %131 {offsets = [0, 96], sizes = [1, 32], strides = [1, 1]} : vector<1x128xf32> to vector<1x32xf32>
    %140 = arith.mulf %133, %121 : vector<1x32xf32>
    %141 = arith.mulf %132, %138 : vector<1x32xf32>
    %142 = arith.addf %140, %141 : vector<1x32xf32>
    %143 = math.tanh %142 : vector<1x32xf32>
    %144 = arith.mulf %139, %143 : vector<1x32xf32>
    %145 = arith.truncf %144 : vector<1x32xf32> to vector<1x32xbf16>
    %cst_34 = arith.constant dense<0.000000e+00> : vector<1x128xf32>
    %146 = tpu.matmul %145, %8, %cst_34 {dimension_numbers = #tpu.dot_dimension_numbers<[1], [0], [0], [1], [0, 0, 1, 1], [], []>} : vector<1x32xbf16>, vector<32x128xbf16>, vector<1x128xf32> -> vector<1x128xf32>
    %147 = arith.addf %15, %146 : vector<1x128xf32>
    %148 = arith.negf %147 : vector<1x128xf32>
    %149 = math.exp %148 : vector<1x128xf32>
    %cst_35 = arith.constant 1.000000e+00 : f32
    %150 = vector.broadcast %cst_35 : f32 to vector<1x128xf32>
    %151 = arith.addf %150, %149 : vector<1x128xf32>
    %152 = arith.divf %150, %151 : vector<1x128xf32>
    %153 = vector.extract_strided_slice %152 {offsets = [0, 0], sizes = [1, 32], strides = [1, 1]} : vector<1x128xf32> to vector<1x32xf32>
    %154 = vector.extract_strided_slice %152 {offsets = [0, 32], sizes = [1, 32], strides = [1, 1]} : vector<1x128xf32> to vector<1x32xf32>
    %155 = vector.extract_strided_slice %152 {offsets = [0, 64], sizes = [1, 32], strides = [1, 1]} : vector<1x128xf32> to vector<1x32xf32>
    %cst_36 = arith.constant 2.000000e+00 : f32
    %156 = vector.broadcast %cst_36 : f32 to vector<1x32xf32>
    %157 = arith.mulf %156, %155 : vector<1x32xf32>
    %cst_37 = arith.constant 1.000000e+00 : f32
    %158 = vector.broadcast %cst_37 : f32 to vector<1x32xf32>
    %159 = arith.subf %157, %158 : vector<1x32xf32>
    %160 = vector.extract_strided_slice %152 {offsets = [0, 96], sizes = [1, 32], strides = [1, 1]} : vector<1x128xf32> to vector<1x32xf32>
    %161 = arith.mulf %154, %142 : vector<1x32xf32>
    %162 = arith.mulf %153, %159 : vector<1x32xf32>
    %163 = arith.addf %161, %162 : vector<1x32xf32>
    %164 = math.tanh %163 : vector<1x32xf32>
    %165 = arith.mulf %160, %164 : vector<1x32xf32>
    %166 = arith.truncf %165 : vector<1x32xf32> to vector<1x32xbf16>
    %cst_38 = arith.constant dense<0.000000e+00> : vector<1x128xf32>
    %167 = tpu.matmul %166, %8, %cst_38 {dimension_numbers = #tpu.dot_dimension_numbers<[1], [0], [0], [1], [0, 0, 1, 1], [], []>} : vector<1x32xbf16>, vector<32x128xbf16>, vector<1x128xf32> -> vector<1x128xf32>
    %168 = arith.addf %16, %167 : vector<1x128xf32>
    %169 = arith.negf %168 : vector<1x128xf32>
    %170 = math.exp %169 : vector<1x128xf32>
    %cst_39 = arith.constant 1.000000e+00 : f32
    %171 = vector.broadcast %cst_39 : f32 to vector<1x128xf32>
    %172 = arith.addf %171, %170 : vector<1x128xf32>
    %173 = arith.divf %171, %172 : vector<1x128xf32>
    %174 = vector.extract_strided_slice %173 {offsets = [0, 0], sizes = [1, 32], strides = [1, 1]} : vector<1x128xf32> to vector<1x32xf32>
    %175 = vector.extract_strided_slice %173 {offsets = [0, 32], sizes = [1, 32], strides = [1, 1]} : vector<1x128xf32> to vector<1x32xf32>
    %176 = vector.extract_strided_slice %173 {offsets = [0, 64], sizes = [1, 32], strides = [1, 1]} : vector<1x128xf32> to vector<1x32xf32>
    %cst_40 = arith.constant 2.000000e+00 : f32
    %177 = vector.broadcast %cst_40 : f32 to vector<1x32xf32>
    %178 = arith.mulf %177, %176 : vector<1x32xf32>
    %cst_41 = arith.constant 1.000000e+00 : f32
    %179 = vector.broadcast %cst_41 : f32 to vector<1x32xf32>
    %180 = arith.subf %178, %179 : vector<1x32xf32>
    %181 = vector.extract_strided_slice %173 {offsets = [0, 96], sizes = [1, 32], strides = [1, 1]} : vector<1x128xf32> to vector<1x32xf32>
    %182 = arith.mulf %175, %163 : vector<1x32xf32>
    %183 = arith.mulf %174, %180 : vector<1x32xf32>
    %184 = arith.addf %182, %183 : vector<1x32xf32>
    %185 = math.tanh %184 : vector<1x32xf32>
    %186 = arith.mulf %181, %185 : vector<1x32xf32>
    %187 = tpu.concatenate %39, %60, %81, %102, %123, %144, %165, %186 in 0 : vector<1x32xf32>, vector<1x32xf32>, vector<1x32xf32>, vector<1x32xf32>, vector<1x32xf32>, vector<1x32xf32>, vector<1x32xf32>, vector<1x32xf32> -> vector<8x32xf32>
    %188 = arith.truncf %187 : vector<8x32xf32> to vector<8x32xbf16>
    %c0_42 = arith.constant 0 : index
    %c0_43 = arith.constant 0 : index
    %189 = vector.load %arg5[%c0_42, %c0_43] : memref<32x128xbf16, #tpu.memory_space<vmem>>, vector<32x128xbf16>
    %cst_44 = arith.constant dense<0.000000e+00> : vector<8x128xf32>
    %190 = tpu.matmul %188, %189, %cst_44 {dimension_numbers = #tpu.dot_dimension_numbers<[1], [0], [0], [1], [0, 0, 1, 1], [], []>} : vector<8x32xbf16>, vector<32x128xbf16>, vector<8x128xf32> -> vector<8x128xf32>
    %c0_45 = arith.constant 0 : index
    %c0_46 = arith.constant 0 : index
    %191 = vector.load %arg7[%c0_45, %c0_46] : memref<1x128xf32, #tpu.memory_space<vmem>>, vector<1x128xf32>
    %192 = vector.broadcast %191 : vector<1x128xf32> to vector<8x128xf32>
    %193 = arith.addf %190, %192 : vector<8x128xf32>
    %c0_47 = arith.constant 0 : index
    %c0_48 = arith.constant 0 : index
    %194 = vector.load %arg6[%c0_47, %c0_48] : memref<32x128xbf16, #tpu.memory_space<vmem>>, vector<32x128xbf16>
    %195 = vector.extract_strided_slice %193 {offsets = [0, 0], sizes = [1, 128], strides = [1, 1]} : vector<8x128xf32> to vector<1x128xf32>
    %196 = vector.extract_strided_slice %193 {offsets = [1, 0], sizes = [1, 128], strides = [1, 1]} : vector<8x128xf32> to vector<1x128xf32>
    %197 = vector.extract_strided_slice %193 {offsets = [2, 0], sizes = [1, 128], strides = [1, 1]} : vector<8x128xf32> to vector<1x128xf32>
    %198 = vector.extract_strided_slice %193 {offsets = [3, 0], sizes = [1, 128], strides = [1, 1]} : vector<8x128xf32> to vector<1x128xf32>
    %199 = vector.extract_strided_slice %193 {offsets = [4, 0], sizes = [1, 128], strides = [1, 1]} : vector<8x128xf32> to vector<1x128xf32>
    %200 = vector.extract_strided_slice %193 {offsets = [5, 0], sizes = [1, 128], strides = [1, 1]} : vector<8x128xf32> to vector<1x128xf32>
    %201 = vector.extract_strided_slice %193 {offsets = [6, 0], sizes = [1, 128], strides = [1, 1]} : vector<8x128xf32> to vector<1x128xf32>
    %202 = vector.extract_strided_slice %193 {offsets = [7, 0], sizes = [1, 128], strides = [1, 1]} : vector<8x128xf32> to vector<1x128xf32>
    %cst_49 = arith.constant 0.000000e+00 : f32
    %203 = vector.broadcast %cst_49 : f32 to vector<1x32xf32>
    %cst_50 = arith.constant 0.000000e+00 : f32
    %204 = vector.broadcast %cst_50 : f32 to vector<1x32xf32>
    %205 = arith.truncf %203 : vector<1x32xf32> to vector<1x32xbf16>
    %cst_51 = arith.constant dense<0.000000e+00> : vector<1x128xf32>
    %206 = tpu.matmul %205, %194, %cst_51 {dimension_numbers = #tpu.dot_dimension_numbers<[1], [0], [0], [1], [0, 0, 1, 1], [], []>} : vector<1x32xbf16>, vector<32x128xbf16>, vector<1x128xf32> -> vector<1x128xf32>
    %207 = arith.addf %195, %206 : vector<1x128xf32>
    %208 = arith.negf %207 : vector<1x128xf32>
    %209 = math.exp %208 : vector<1x128xf32>
    %cst_52 = arith.constant 1.000000e+00 : f32
    %210 = vector.broadcast %cst_52 : f32 to vector<1x128xf32>
    %211 = arith.addf %210, %209 : vector<1x128xf32>
    %212 = arith.divf %210, %211 : vector<1x128xf32>
    %213 = vector.extract_strided_slice %212 {offsets = [0, 0], sizes = [1, 32], strides = [1, 1]} : vector<1x128xf32> to vector<1x32xf32>
    %214 = vector.extract_strided_slice %212 {offsets = [0, 32], sizes = [1, 32], strides = [1, 1]} : vector<1x128xf32> to vector<1x32xf32>
    %215 = vector.extract_strided_slice %212 {offsets = [0, 64], sizes = [1, 32], strides = [1, 1]} : vector<1x128xf32> to vector<1x32xf32>
    %cst_53 = arith.constant 2.000000e+00 : f32
    %216 = vector.broadcast %cst_53 : f32 to vector<1x32xf32>
    %217 = arith.mulf %216, %215 : vector<1x32xf32>
    %cst_54 = arith.constant 1.000000e+00 : f32
    %218 = vector.broadcast %cst_54 : f32 to vector<1x32xf32>
    %219 = arith.subf %217, %218 : vector<1x32xf32>
    %220 = vector.extract_strided_slice %212 {offsets = [0, 96], sizes = [1, 32], strides = [1, 1]} : vector<1x128xf32> to vector<1x32xf32>
    %221 = arith.mulf %214, %204 : vector<1x32xf32>
    %222 = arith.mulf %213, %219 : vector<1x32xf32>
    %223 = arith.addf %221, %222 : vector<1x32xf32>
    %224 = math.tanh %223 : vector<1x32xf32>
    %225 = arith.mulf %220, %224 : vector<1x32xf32>
    %226 = arith.truncf %225 : vector<1x32xf32> to vector<1x32xbf16>
    %cst_55 = arith.constant dense<0.000000e+00> : vector<1x128xf32>
    %227 = tpu.matmul %226, %194, %cst_55 {dimension_numbers = #tpu.dot_dimension_numbers<[1], [0], [0], [1], [0, 0, 1, 1], [], []>} : vector<1x32xbf16>, vector<32x128xbf16>, vector<1x128xf32> -> vector<1x128xf32>
    %228 = arith.addf %196, %227 : vector<1x128xf32>
    %229 = arith.negf %228 : vector<1x128xf32>
    %230 = math.exp %229 : vector<1x128xf32>
    %cst_56 = arith.constant 1.000000e+00 : f32
    %231 = vector.broadcast %cst_56 : f32 to vector<1x128xf32>
    %232 = arith.addf %231, %230 : vector<1x128xf32>
    %233 = arith.divf %231, %232 : vector<1x128xf32>
    %234 = vector.extract_strided_slice %233 {offsets = [0, 0], sizes = [1, 32], strides = [1, 1]} : vector<1x128xf32> to vector<1x32xf32>
    %235 = vector.extract_strided_slice %233 {offsets = [0, 32], sizes = [1, 32], strides = [1, 1]} : vector<1x128xf32> to vector<1x32xf32>
    %236 = vector.extract_strided_slice %233 {offsets = [0, 64], sizes = [1, 32], strides = [1, 1]} : vector<1x128xf32> to vector<1x32xf32>
    %cst_57 = arith.constant 2.000000e+00 : f32
    %237 = vector.broadcast %cst_57 : f32 to vector<1x32xf32>
    %238 = arith.mulf %237, %236 : vector<1x32xf32>
    %cst_58 = arith.constant 1.000000e+00 : f32
    %239 = vector.broadcast %cst_58 : f32 to vector<1x32xf32>
    %240 = arith.subf %238, %239 : vector<1x32xf32>
    %241 = vector.extract_strided_slice %233 {offsets = [0, 96], sizes = [1, 32], strides = [1, 1]} : vector<1x128xf32> to vector<1x32xf32>
    %242 = arith.mulf %235, %223 : vector<1x32xf32>
    %243 = arith.mulf %234, %240 : vector<1x32xf32>
    %244 = arith.addf %242, %243 : vector<1x32xf32>
    %245 = math.tanh %244 : vector<1x32xf32>
    %246 = arith.mulf %241, %245 : vector<1x32xf32>
    %247 = arith.truncf %246 : vector<1x32xf32> to vector<1x32xbf16>
    %cst_59 = arith.constant dense<0.000000e+00> : vector<1x128xf32>
    %248 = tpu.matmul %247, %194, %cst_59 {dimension_numbers = #tpu.dot_dimension_numbers<[1], [0], [0], [1], [0, 0, 1, 1], [], []>} : vector<1x32xbf16>, vector<32x128xbf16>, vector<1x128xf32> -> vector<1x128xf32>
    %249 = arith.addf %197, %248 : vector<1x128xf32>
    %250 = arith.negf %249 : vector<1x128xf32>
    %251 = math.exp %250 : vector<1x128xf32>
    %cst_60 = arith.constant 1.000000e+00 : f32
    %252 = vector.broadcast %cst_60 : f32 to vector<1x128xf32>
    %253 = arith.addf %252, %251 : vector<1x128xf32>
    %254 = arith.divf %252, %253 : vector<1x128xf32>
    %255 = vector.extract_strided_slice %254 {offsets = [0, 0], sizes = [1, 32], strides = [1, 1]} : vector<1x128xf32> to vector<1x32xf32>
    %256 = vector.extract_strided_slice %254 {offsets = [0, 32], sizes = [1, 32], strides = [1, 1]} : vector<1x128xf32> to vector<1x32xf32>
    %257 = vector.extract_strided_slice %254 {offsets = [0, 64], sizes = [1, 32], strides = [1, 1]} : vector<1x128xf32> to vector<1x32xf32>
    %cst_61 = arith.constant 2.000000e+00 : f32
    %258 = vector.broadcast %cst_61 : f32 to vector<1x32xf32>
    %259 = arith.mulf %258, %257 : vector<1x32xf32>
    %cst_62 = arith.constant 1.000000e+00 : f32
    %260 = vector.broadcast %cst_62 : f32 to vector<1x32xf32>
    %261 = arith.subf %259, %260 : vector<1x32xf32>
    %262 = vector.extract_strided_slice %254 {offsets = [0, 96], sizes = [1, 32], strides = [1, 1]} : vector<1x128xf32> to vector<1x32xf32>
    %263 = arith.mulf %256, %244 : vector<1x32xf32>
    %264 = arith.mulf %255, %261 : vector<1x32xf32>
    %265 = arith.addf %263, %264 : vector<1x32xf32>
    %266 = math.tanh %265 : vector<1x32xf32>
    %267 = arith.mulf %262, %266 : vector<1x32xf32>
    %268 = arith.truncf %267 : vector<1x32xf32> to vector<1x32xbf16>
    %cst_63 = arith.constant dense<0.000000e+00> : vector<1x128xf32>
    %269 = tpu.matmul %268, %194, %cst_63 {dimension_numbers = #tpu.dot_dimension_numbers<[1], [0], [0], [1], [0, 0, 1, 1], [], []>} : vector<1x32xbf16>, vector<32x128xbf16>, vector<1x128xf32> -> vector<1x128xf32>
    %270 = arith.addf %198, %269 : vector<1x128xf32>
    %271 = arith.negf %270 : vector<1x128xf32>
    %272 = math.exp %271 : vector<1x128xf32>
    %cst_64 = arith.constant 1.000000e+00 : f32
    %273 = vector.broadcast %cst_64 : f32 to vector<1x128xf32>
    %274 = arith.addf %273, %272 : vector<1x128xf32>
    %275 = arith.divf %273, %274 : vector<1x128xf32>
    %276 = vector.extract_strided_slice %275 {offsets = [0, 0], sizes = [1, 32], strides = [1, 1]} : vector<1x128xf32> to vector<1x32xf32>
    %277 = vector.extract_strided_slice %275 {offsets = [0, 32], sizes = [1, 32], strides = [1, 1]} : vector<1x128xf32> to vector<1x32xf32>
    %278 = vector.extract_strided_slice %275 {offsets = [0, 64], sizes = [1, 32], strides = [1, 1]} : vector<1x128xf32> to vector<1x32xf32>
    %cst_65 = arith.constant 2.000000e+00 : f32
    %279 = vector.broadcast %cst_65 : f32 to vector<1x32xf32>
    %280 = arith.mulf %279, %278 : vector<1x32xf32>
    %cst_66 = arith.constant 1.000000e+00 : f32
    %281 = vector.broadcast %cst_66 : f32 to vector<1x32xf32>
    %282 = arith.subf %280, %281 : vector<1x32xf32>
    %283 = vector.extract_strided_slice %275 {offsets = [0, 96], sizes = [1, 32], strides = [1, 1]} : vector<1x128xf32> to vector<1x32xf32>
    %284 = arith.mulf %277, %265 : vector<1x32xf32>
    %285 = arith.mulf %276, %282 : vector<1x32xf32>
    %286 = arith.addf %284, %285 : vector<1x32xf32>
    %287 = math.tanh %286 : vector<1x32xf32>
    %288 = arith.mulf %283, %287 : vector<1x32xf32>
    %289 = arith.truncf %288 : vector<1x32xf32> to vector<1x32xbf16>
    %cst_67 = arith.constant dense<0.000000e+00> : vector<1x128xf32>
    %290 = tpu.matmul %289, %194, %cst_67 {dimension_numbers = #tpu.dot_dimension_numbers<[1], [0], [0], [1], [0, 0, 1, 1], [], []>} : vector<1x32xbf16>, vector<32x128xbf16>, vector<1x128xf32> -> vector<1x128xf32>
    %291 = arith.addf %199, %290 : vector<1x128xf32>
    %292 = arith.negf %291 : vector<1x128xf32>
    %293 = math.exp %292 : vector<1x128xf32>
    %cst_68 = arith.constant 1.000000e+00 : f32
    %294 = vector.broadcast %cst_68 : f32 to vector<1x128xf32>
    %295 = arith.addf %294, %293 : vector<1x128xf32>
    %296 = arith.divf %294, %295 : vector<1x128xf32>
    %297 = vector.extract_strided_slice %296 {offsets = [0, 0], sizes = [1, 32], strides = [1, 1]} : vector<1x128xf32> to vector<1x32xf32>
    %298 = vector.extract_strided_slice %296 {offsets = [0, 32], sizes = [1, 32], strides = [1, 1]} : vector<1x128xf32> to vector<1x32xf32>
    %299 = vector.extract_strided_slice %296 {offsets = [0, 64], sizes = [1, 32], strides = [1, 1]} : vector<1x128xf32> to vector<1x32xf32>
    %cst_69 = arith.constant 2.000000e+00 : f32
    %300 = vector.broadcast %cst_69 : f32 to vector<1x32xf32>
    %301 = arith.mulf %300, %299 : vector<1x32xf32>
    %cst_70 = arith.constant 1.000000e+00 : f32
    %302 = vector.broadcast %cst_70 : f32 to vector<1x32xf32>
    %303 = arith.subf %301, %302 : vector<1x32xf32>
    %304 = vector.extract_strided_slice %296 {offsets = [0, 96], sizes = [1, 32], strides = [1, 1]} : vector<1x128xf32> to vector<1x32xf32>
    %305 = arith.mulf %298, %286 : vector<1x32xf32>
    %306 = arith.mulf %297, %303 : vector<1x32xf32>
    %307 = arith.addf %305, %306 : vector<1x32xf32>
    %308 = math.tanh %307 : vector<1x32xf32>
    %309 = arith.mulf %304, %308 : vector<1x32xf32>
    %310 = arith.truncf %309 : vector<1x32xf32> to vector<1x32xbf16>
    %cst_71 = arith.constant dense<0.000000e+00> : vector<1x128xf32>
    %311 = tpu.matmul %310, %194, %cst_71 {dimension_numbers = #tpu.dot_dimension_numbers<[1], [0], [0], [1], [0, 0, 1, 1], [], []>} : vector<1x32xbf16>, vector<32x128xbf16>, vector<1x128xf32> -> vector<1x128xf32>
    %312 = arith.addf %200, %311 : vector<1x128xf32>
    %313 = arith.negf %312 : vector<1x128xf32>
    %314 = math.exp %313 : vector<1x128xf32>
    %cst_72 = arith.constant 1.000000e+00 : f32
    %315 = vector.broadcast %cst_72 : f32 to vector<1x128xf32>
    %316 = arith.addf %315, %314 : vector<1x128xf32>
    %317 = arith.divf %315, %316 : vector<1x128xf32>
    %318 = vector.extract_strided_slice %317 {offsets = [0, 0], sizes = [1, 32], strides = [1, 1]} : vector<1x128xf32> to vector<1x32xf32>
    %319 = vector.extract_strided_slice %317 {offsets = [0, 32], sizes = [1, 32], strides = [1, 1]} : vector<1x128xf32> to vector<1x32xf32>
    %320 = vector.extract_strided_slice %317 {offsets = [0, 64], sizes = [1, 32], strides = [1, 1]} : vector<1x128xf32> to vector<1x32xf32>
    %cst_73 = arith.constant 2.000000e+00 : f32
    %321 = vector.broadcast %cst_73 : f32 to vector<1x32xf32>
    %322 = arith.mulf %321, %320 : vector<1x32xf32>
    %cst_74 = arith.constant 1.000000e+00 : f32
    %323 = vector.broadcast %cst_74 : f32 to vector<1x32xf32>
    %324 = arith.subf %322, %323 : vector<1x32xf32>
    %325 = vector.extract_strided_slice %317 {offsets = [0, 96], sizes = [1, 32], strides = [1, 1]} : vector<1x128xf32> to vector<1x32xf32>
    %326 = arith.mulf %319, %307 : vector<1x32xf32>
    %327 = arith.mulf %318, %324 : vector<1x32xf32>
    %328 = arith.addf %326, %327 : vector<1x32xf32>
    %329 = math.tanh %328 : vector<1x32xf32>
    %330 = arith.mulf %325, %329 : vector<1x32xf32>
    %331 = arith.truncf %330 : vector<1x32xf32> to vector<1x32xbf16>
    %cst_75 = arith.constant dense<0.000000e+00> : vector<1x128xf32>
    %332 = tpu.matmul %331, %194, %cst_75 {dimension_numbers = #tpu.dot_dimension_numbers<[1], [0], [0], [1], [0, 0, 1, 1], [], []>} : vector<1x32xbf16>, vector<32x128xbf16>, vector<1x128xf32> -> vector<1x128xf32>
    %333 = arith.addf %201, %332 : vector<1x128xf32>
    %334 = arith.negf %333 : vector<1x128xf32>
    %335 = math.exp %334 : vector<1x128xf32>
    %cst_76 = arith.constant 1.000000e+00 : f32
    %336 = vector.broadcast %cst_76 : f32 to vector<1x128xf32>
    %337 = arith.addf %336, %335 : vector<1x128xf32>
    %338 = arith.divf %336, %337 : vector<1x128xf32>
    %339 = vector.extract_strided_slice %338 {offsets = [0, 0], sizes = [1, 32], strides = [1, 1]} : vector<1x128xf32> to vector<1x32xf32>
    %340 = vector.extract_strided_slice %338 {offsets = [0, 32], sizes = [1, 32], strides = [1, 1]} : vector<1x128xf32> to vector<1x32xf32>
    %341 = vector.extract_strided_slice %338 {offsets = [0, 64], sizes = [1, 32], strides = [1, 1]} : vector<1x128xf32> to vector<1x32xf32>
    %cst_77 = arith.constant 2.000000e+00 : f32
    %342 = vector.broadcast %cst_77 : f32 to vector<1x32xf32>
    %343 = arith.mulf %342, %341 : vector<1x32xf32>
    %cst_78 = arith.constant 1.000000e+00 : f32
    %344 = vector.broadcast %cst_78 : f32 to vector<1x32xf32>
    %345 = arith.subf %343, %344 : vector<1x32xf32>
    %346 = vector.extract_strided_slice %338 {offsets = [0, 96], sizes = [1, 32], strides = [1, 1]} : vector<1x128xf32> to vector<1x32xf32>
    %347 = arith.mulf %340, %328 : vector<1x32xf32>
    %348 = arith.mulf %339, %345 : vector<1x32xf32>
    %349 = arith.addf %347, %348 : vector<1x32xf32>
    %350 = math.tanh %349 : vector<1x32xf32>
    %351 = arith.mulf %346, %350 : vector<1x32xf32>
    %352 = arith.truncf %351 : vector<1x32xf32> to vector<1x32xbf16>
    %cst_79 = arith.constant dense<0.000000e+00> : vector<1x128xf32>
    %353 = tpu.matmul %352, %194, %cst_79 {dimension_numbers = #tpu.dot_dimension_numbers<[1], [0], [0], [1], [0, 0, 1, 1], [], []>} : vector<1x32xbf16>, vector<32x128xbf16>, vector<1x128xf32> -> vector<1x128xf32>
    %354 = arith.addf %202, %353 : vector<1x128xf32>
    %355 = arith.negf %354 : vector<1x128xf32>
    %356 = math.exp %355 : vector<1x128xf32>
    %cst_80 = arith.constant 1.000000e+00 : f32
    %357 = vector.broadcast %cst_80 : f32 to vector<1x128xf32>
    %358 = arith.addf %357, %356 : vector<1x128xf32>
    %359 = arith.divf %357, %358 : vector<1x128xf32>
    %360 = vector.extract_strided_slice %359 {offsets = [0, 0], sizes = [1, 32], strides = [1, 1]} : vector<1x128xf32> to vector<1x32xf32>
    %361 = vector.extract_strided_slice %359 {offsets = [0, 32], sizes = [1, 32], strides = [1, 1]} : vector<1x128xf32> to vector<1x32xf32>
    %362 = vector.extract_strided_slice %359 {offsets = [0, 64], sizes = [1, 32], strides = [1, 1]} : vector<1x128xf32> to vector<1x32xf32>
    %cst_81 = arith.constant 2.000000e+00 : f32
    %363 = vector.broadcast %cst_81 : f32 to vector<1x32xf32>
    %364 = arith.mulf %363, %362 : vector<1x32xf32>
    %cst_82 = arith.constant 1.000000e+00 : f32
    %365 = vector.broadcast %cst_82 : f32 to vector<1x32xf32>
    %366 = arith.subf %364, %365 : vector<1x32xf32>
    %367 = vector.extract_strided_slice %359 {offsets = [0, 96], sizes = [1, 32], strides = [1, 1]} : vector<1x128xf32> to vector<1x32xf32>
    %368 = arith.mulf %361, %349 : vector<1x32xf32>
    %369 = arith.mulf %360, %366 : vector<1x32xf32>
    %370 = arith.addf %368, %369 : vector<1x32xf32>
    %371 = math.tanh %370 : vector<1x32xf32>
    %372 = arith.mulf %367, %371 : vector<1x32xf32>
    %373 = tpu.concatenate %225, %246, %267, %288, %309, %330, %351, %372 in 0 : vector<1x32xf32>, vector<1x32xf32>, vector<1x32xf32>, vector<1x32xf32>, vector<1x32xf32>, vector<1x32xf32>, vector<1x32xf32>, vector<1x32xf32> -> vector<8x32xf32>
    %374 = math.tanh %373 : vector<8x32xf32>
    %375 = arith.truncf %374 : vector<8x32xf32> to vector<8x32xbf16>
    %c0_83 = arith.constant 0 : index
    %c0_84 = arith.constant 0 : index
    %376 = vector.load %arg8[%c0_83, %c0_84] : memref<32x5xbf16, #tpu.memory_space<vmem>>, vector<32x5xbf16>
    %cst_85 = arith.constant dense<0.000000e+00> : vector<8x5xf32>
    %377 = tpu.matmul %375, %376, %cst_85 {dimension_numbers = #tpu.dot_dimension_numbers<[1], [0], [0], [1], [0, 0, 1, 1], [], []>} : vector<8x32xbf16>, vector<32x5xbf16>, vector<8x5xf32> -> vector<8x5xf32>
    %c0_86 = arith.constant 0 : index
    %c0_87 = arith.constant 0 : index
    %378 = vector.load %arg9[%c0_86, %c0_87] : memref<1x5xf32, #tpu.memory_space<vmem>>, vector<1x5xf32>
    %379 = vector.broadcast %378 : vector<1x5xf32> to vector<8x5xf32>
    %380 = arith.addf %377, %379 : vector<8x5xf32>
    %c0_88 = arith.constant 0 : index
    %c0_89 = arith.constant 0 : index
    %c0_90 = arith.constant 0 : index
    %381 = vector.load %arg10[%c0_88, %c0_89, %c0_90] : memref<1x8x5xf32, #tpu.memory_space<vmem>>, vector<1x8x5xf32>
    %382 = vector.shape_cast %381 : vector<1x8x5xf32> to vector<8x5xf32>
    %383 = vector.shape_cast %380 : vector<8x5xf32> to vector<1x8x5xf32>
    tpu.vector_store %arg10[%c0_88, %c0_89, %c0_90], %383 {strides = array<i32>} : memref<1x8x5xf32, #tpu.memory_space<vmem>>, vector<1x8x5xf32>,
    return
  }
  func.func @transform_0(%arg0: i32) -> (i32, i32, i32) {
    %c0_i32 = arith.constant 0 : i32
    %c0_i32_0 = arith.constant 0 : i32
    %c0_i32_1 = arith.constant 0 : i32
    return %arg0, %c0_i32, %c0_i32_0 : i32, i32, i32
  }
  func.func @transform_1(%arg0: i32) -> (i32, i32) {
    %c0_i32 = arith.constant 0 : i32
    %c0_i32_0 = arith.constant 0 : i32
    %c0_i32_1 = arith.constant 0 : i32
    return %c0_i32, %c0_i32_0 : i32, i32
  }
  func.func @transform_2(%arg0: i32) -> (i32, i32) {
    %c0_i32 = arith.constant 0 : i32
    %c0_i32_0 = arith.constant 0 : i32
    %c0_i32_1 = arith.constant 0 : i32
    return %c0_i32, %c0_i32_0 : i32, i32
  }
  func.func @transform_3(%arg0: i32) -> (i32, i32) {
    %c0_i32 = arith.constant 0 : i32
    %c0_i32_0 = arith.constant 0 : i32
    %c0_i32_1 = arith.constant 0 : i32
    return %c0_i32, %c0_i32_0 : i32, i32
  }
  func.func @transform_4(%arg0: i32) -> (i32, i32) {
    %c0_i32 = arith.constant 0 : i32
    %c0_i32_0 = arith.constant 0 : i32
    %c0_i32_1 = arith.constant 0 : i32
    return %c0_i32, %c0_i32_0 : i32, i32
  }
  func.func @transform_5(%arg0: i32) -> (i32, i32) {
    %c0_i32 = arith.constant 0 : i32
    %c0_i32_0 = arith.constant 0 : i32
    %c0_i32_1 = arith.constant 0 : i32
    return %c0_i32, %c0_i32_0 : i32, i32
  }
  func.func @transform_6(%arg0: i32) -> (i32, i32) {
    %c0_i32 = arith.constant 0 : i32
    %c0_i32_0 = arith.constant 0 : i32
    %c0_i32_1 = arith.constant 0 : i32
    return %c0_i32, %c0_i32_0 : i32, i32
  }
  func.func @transform_7(%arg0: i32) -> (i32, i32) {
    %c0_i32 = arith.constant 0 : i32
    %c0_i32_0 = arith.constant 0 : i32
    %c0_i32_1 = arith.constant 0 : i32
    return %c0_i32, %c0_i32_0 : i32, i32
  }
  func.func @transform_8(%arg0: i32) -> (i32, i32) {
    %c0_i32 = arith.constant 0 : i32
    %c0_i32_0 = arith.constant 0 : i32
    %c0_i32_1 = arith.constant 0 : i32
    return %c0_i32, %c0_i32_0 : i32, i32
  }
  func.func @transform_9(%arg0: i32) -> (i32, i32, i32) {
    %c0_i32 = arith.constant 0 : i32
    %c0_i32_0 = arith.constant 0 : i32
    %c0_i32_1 = arith.constant 0 : i32
    return %arg0, %c0_i32, %c0_i32_0 : i32, i32, i32
  }
}

</mosaic_0001>

<llo_original>
// kernel: tpu_custom_call.1
$region0: #{tpu_custom_call.1}
  #allocation0 [shape = 'u32[]', space=smem, size = 0x4, offset = 0x4, fixed_abs, tag = 'smem constant byte address 0x4 - core index']
  #allocation1 [shape = 'u32[144,128]{1,0:T(1,128)}', space=vmem, size = 0x12000, scoped, tag = 'internal scratch']
  %s0 = inlined_call_operand.vmem [shape: f32[2,8,16], index: 0, kind: input, shape index: {}]
  %s1 = inlined_call_operand.hbm [shape: bf16[16,128], index: 1, kind: input, shape index: {}]
  %s2 = inlined_call_operand.hbm [shape: bf16[32,128], index: 2, kind: input, shape index: {}]
  %s3 = inlined_call_operand.vmem [shape: f32[1,128], index: 3, kind: input, shape index: {}]
  %s4 = inlined_call_operand.vmem [shape: bf16[32,128], index: 4, kind: input, shape index: {}]
  %s5 = inlined_call_operand.hbm [shape: bf16[32,128], index: 5, kind: input, shape index: {}]
  %s6 = inlined_call_operand.vmem [shape: f32[1,128], index: 6, kind: input, shape index: {}]
  %s7 = inlined_call_operand.vmem [shape: bf16[32,5], index: 7, kind: input, shape index: {}]
  %s8 = inlined_call_operand.vmem [shape: f32[1,5], index: 8, kind: input, shape index: {}]
  %s9 = inlined_call_operand.vmem [shape: f32[2,8,5], index: 9, kind: output, shape index: {}]
  %s10 = sld [smem:[#allocation0]]
  $region81: #{tpu_custom_call.1} parent=0
    _
  %s12 = ssub.s32 1, %s10
  %s13 = scalar_select 0, %s12, %s10
  $region1: #{tpu_custom_call.1} parent=0
    #allocation2 [shape = 'u8[4096]{0}', space=vmem, size = 0x1000, scoped, tag = 'input window, operand 1, single buffered']
    #allocation3 [shape = 's32[2]{0}', space=sflag, size = 0x8, scoped, tag = 'scoped memory for tpu_custom_call.1']
    #allocation4 [shape = 'u8[8192]{0}', space=vmem, size = 0x2000, scoped, tag = 'input window, operand 2, single buffered']
    #allocation5 [shape = 's32[1]{0}', space=sflag, size = 0x4, scoped, tag = 'scoped memory for tpu_custom_call.1']
    #allocation6 [shape = 'u8[8192]{0}', space=vmem, size = 0x2000, scoped, tag = 'input window, operand 5, single buffered']
    %14 = vsyncpa [#allocation3], 0
    %15 = vsyncpa [#allocation5], 0
    loop: start=0, step=1, limit=4
    $region2: #{tpu_custom_call.1} parent=1 // loop_pre_header
      _
    $region3: #{tpu_custom_call.1} parent=1 // loop_header
      %s17 = sphi 0, %s21
      %p18 = scmp.ge.s32.totalorder %s17, 4
      %s27 = sphi 0, %s29
      %s30 = sphi 0, %s27
      %s31 = sphi 0, %s30
      %s47 = sphi 0, %s31
      %s51 = sphi 0, %s51
      %s53 = sphi 0, %s51
      %s54 = sphi 0, %s53
      %s68 = sphi 0, %s54
      %s72 = sphi 0, %s72
      %s74 = sphi 0, %s72
      %s75 = sphi 0, %s74
      %s89 = sphi 0, %s75
      %s93 = sphi 0, %s93
      %s95 = sphi 0, %s93
      %s96 = sphi 0, %s95
      %s110 = sphi 0, %s96
      %s114 = sphi 0, %s114
      %s116 = sphi 0, %s114
      %s117 = sphi 0, %s116
      %s131 = sphi 0, %s117
      %s135 = sphi 0, %s135
      %s137 = sphi 0, %s135
      %s138 = sphi 0, %s137
      %s152 = sphi 0, %s138
      %s156 = sphi 0, %s156
      %s158 = sphi 0, %s156
      %s159 = sphi 0, %s158
      %s173 = sphi 0, %s159
      %s177 = sphi 0, %s177
      %s179 = sphi 0, %s177
      %s180 = sphi 0, %s179
      %s194 = sphi 0, %s180
      %s198 = sphi 0, %s198
      %s200 = sphi 0, %s198
      %s201 = sphi 0, %s200
      %s215 = sphi 0, %s201
      %s221 = sphi 0, %s223
      %s224 = sphi 0, %s221
      %s225 = sphi 0, %s224
      %s241 = sphi 0, %s225
    $region4: #{tpu_custom_call.1} parent=1 // loop_header_branch
      %20 = sbr.rel (%p18) target = $region8
    $region5: #{tpu_custom_call.1} parent=1 // loop_body
      %s22 = ssub.s32 %s17, 1
      %s23 = ssub.s32 %s17, 2
      %s24 = sadd.s32 %s17, 1
      %s25 = ssub.s32 %s17, %s24
      %p26 = scmp.eq.s32.totalorder %s25, 0
      %s28 = sadd.s32 %s27, 1
      %s29 = scalar_select %p26, %s27, %s28
      %p32 = pneg %p26
      %p33 = scmp.eq.s32.totalorder %s17, 1
      %p34 = por %p32, %p33
      %p35 = scmp.ne.s32.totalorder %s27, %s30
      %p36 = scmp.eq.s32.totalorder %s17, 0
      %p37 = por %p35, %p36
      %p38 = scmp.ne.s32.totalorder %s27, %s30
      %p39 = scmp.eq.s32.totalorder %s22, 1
      %p40 = por %p38, %p39
      %p41 = scmp.ne.s32.totalorder %s30, %s31
      %p42 = scmp.eq.s32.totalorder %s22, 0
      %p43 = por %p41, %p42
      %p44 = scmp.ne.s32.totalorder %s30, %s31
      %p45 = scmp.eq.s32.totalorder %s23, 1
      %p46 = por %p44, %p45
      %p48 = scmp.ne.s32.totalorder %s31, %s47
      %p49 = scmp.eq.s32.totalorder %s23, 0
      %p50 = por %p48, %p49
      %s52 = sadd.s32 %s51, 1
      %p55 = scmp.eq.s32.totalorder %s17, 1
      %p56 = scmp.ne.s32.totalorder %s51, %s53
      %p57 = scmp.eq.s32.totalorder %s17, 0
      %p58 = por %p56, %p57
      %p59 = scmp.ne.s32.totalorder %s51, %s53
      %p60 = scmp.eq.s32.totalorder %s22, 1
      %p61 = por %p59, %p60
      %p62 = scmp.ne.s32.totalorder %s53, %s54
      %p63 = scmp.eq.s32.totalorder %s22, 0
      %p64 = por %p62, %p63
      %p65 = scmp.ne.s32.totalorder %s53, %s54
      %p66 = scmp.eq.s32.totalorder %s23, 1
      %p67 = por %p65, %p66
      %p69 = scmp.ne.s32.totalorder %s54, %s68
      %p70 = scmp.eq.s32.totalorder %s23, 0
      %p71 = por %p69, %p70
      %s73 = sadd.s32 %s72, 1
      %p76 = scmp.eq.s32.totalorder %s17, 1
      %p77 = scmp.ne.s32.totalorder %s72, %s74
      %p78 = scmp.eq.s32.totalorder %s17, 0
      %p79 = por %p77, %p78
      %p80 = scmp.ne.s32.totalorder %s72, %s74
      %p81 = scmp.eq.s32.totalorder %s22, 1
      %p82 = por %p80, %p81
      %p83 = scmp.ne.s32.totalorder %s74, %s75
      %p84 = scmp.eq.s32.totalorder %s22, 0
      %p85 = por %p83, %p84
      %p86 = scmp.ne.s32.totalorder %s74, %s75
      %p87 = scmp.eq.s32.totalorder %s23, 1
      %p88 = por %p86, %p87
      %p90 = scmp.ne.s32.totalorder %s75, %s89
      %p91 = scmp.eq.s32.totalorder %s23, 0
      %p92 = por %p90, %p91
      %s94 = sadd.s32 %s93, 1
      %p97 = scmp.eq.s32.totalorder %s17, 1
      %p98 = scmp.ne.s32.totalorder %s93, %s95
      %p99 = scmp.eq.s32.totalorder %s17, 0
      %p100 = por %p98, %p99
      %p101 = scmp.ne.s32.totalorder %s93, %s95
      %p102 = scmp.eq.s32.totalorder %s22, 1
      %p103 = por %p101, %p102
      %p104 = scmp.ne.s32.totalorder %s95, %s96
      %p105 = scmp.eq.s32.totalorder %s22, 0
      %p106 = por %p104, %p105
      %p107 = scmp.ne.s32.totalorder %s95, %s96
      %p108 = scmp.eq.s32.totalorder %s23, 1
      %p109 = por %p107, %p108
      %p111 = scmp.ne.s32.totalorder %s96, %s110
      %p112 = scmp.eq.s32.totalorder %s23, 0
      %p113 = por %p111, %p112
      %s115 = sadd.s32 %s114, 1
      %p118 = scmp.eq.s32.totalorder %s17, 1
      %p119 = scmp.ne.s32.totalorder %s114, %s116
      %p120 = scmp.eq.s32.totalorder %s17, 0
      %p121 = por %p119, %p120
      %p122 = scmp.ne.s32.totalorder %s114, %s116
      %p123 = scmp.eq.s32.totalorder %s22, 1
      %p124 = por %p122, %p123
      %p125 = scmp.ne.s32.totalorder %s116, %s117
      %p126 = scmp.eq.s32.totalorder %s22, 0
      %p127 = por %p125, %p126
      %p128 = scmp.ne.s32.totalorder %s116, %s117
      %p129 = scmp.eq.s32.totalorder %s23, 1
      %p130 = por %p128, %p129
      %p132 = scmp.ne.s32.totalorder %s117, %s131
      %p133 = scmp.eq.s32.totalorder %s23, 0
      %p134 = por %p132, %p133
      %s136 = sadd.s32 %s135, 1
      %p139 = scmp.eq.s32.totalorder %s17, 1
      %p140 = scmp.ne.s32.totalorder %s135, %s137
      %p141 = scmp.eq.s32.totalorder %s17, 0
      %p142 = por %p140, %p141
      %p143 = scmp.ne.s32.totalorder %s135, %s137
      %p144 = scmp.eq.s32.totalorder %s22, 1
      %p145 = por %p143, %p144
      %p146 = scmp.ne.s32.totalorder %s137, %s138
      %p147 = scmp.eq.s32.totalorder %s22, 0
      %p148 = por %p146, %p147
      %p149 = scmp.ne.s32.totalorder %s137, %s138
      %p150 = scmp.eq.s32.totalorder %s23, 1
      %p151 = por %p149, %p150
      %p153 = scmp.ne.s32.totalorder %s138, %s152
      %p154 = scmp.eq.s32.totalorder %s23, 0
      %p155 = por %p153, %p154
      %s157 = sadd.s32 %s156, 1
      %p160 = scmp.eq.s32.totalorder %s17, 1
      %p161 = scmp.ne.s32.totalorder %s156, %s158
      %p162 = scmp.eq.s32.totalorder %s17, 0
      %p163 = por %p161, %p162
      %p164 = scmp.ne.s32.totalorder %s156, %s158
      %p165 = scmp.eq.s32.totalorder %s22, 1
      %p166 = por %p164, %p165
      %p167 = scmp.ne.s32.totalorder %s158, %s159
      %p168 = scmp.eq.s32.totalorder %s22, 0
      %p169 = por %p167, %p168
      %p170 = scmp.ne.s32.totalorder %s158, %s159
      %p171 = scmp.eq.s32.totalorder %s23, 1
      %p172 = por %p170, %p171
      %p174 = scmp.ne.s32.totalorder %s159, %s173
      %p175 = scmp.eq.s32.totalorder %s23, 0
      %p176 = por %p174, %p175
      %s178 = sadd.s32 %s177, 1
      %p181 = scmp.eq.s32.totalorder %s17, 1
      %p182 = scmp.ne.s32.totalorder %s177, %s179
      %p183 = scmp.eq.s32.totalorder %s17, 0
      %p184 = por %p182, %p183
      %p185 = scmp.ne.s32.totalorder %s177, %s179
      %p186 = scmp.eq.s32.totalorder %s22, 1
      %p187 = por %p185, %p186
      %p188 = scmp.ne.s32.totalorder %s179, %s180
      %p189 = scmp.eq.s32.totalorder %s22, 0
      %p190 = por %p188, %p189
      %p191 = scmp.ne.s32.totalorder %s179, %s180
      %p192 = scmp.eq.s32.totalorder %s23, 1
      %p193 = por %p191, %p192
      %p195 = scmp.ne.s32.totalorder %s180, %s194
      %p196 = scmp.eq.s32.totalorder %s23, 0
      %p197 = por %p195, %p196
      %s199 = sadd.s32 %s198, 1
      %p202 = scmp.eq.s32.totalorder %s17, 1
      %p203 = scmp.ne.s32.totalorder %s198, %s200
      %p204 = scmp.eq.s32.totalorder %s17, 0
      %p205 = por %p203, %p204
      %p206 = scmp.ne.s32.totalorder %s198, %s200
      %p207 = scmp.eq.s32.totalorder %s22, 1
      %p208 = por %p206, %p207
      %p209 = scmp.ne.s32.totalorder %s200, %s201
      %p210 = scmp.eq.s32.totalorder %s22, 0
      %p211 = por %p209, %p210
      %p212 = scmp.ne.s32.totalorder %s200, %s201
      %p213 = scmp.eq.s32.totalorder %s23, 1
      %p214 = por %p212, %p213
      %p216 = scmp.ne.s32.totalorder %s201, %s215
      %p217 = scmp.eq.s32.totalorder %s23, 0
      %p218 = por %p216, %p217
      %s219 = ssub.s32 %s17, %s24
      %p220 = scmp.eq.s32.totalorder %s219, 0
      %s222 = sadd.s32 %s221, 1
      %s223 = scalar_select %p220, %s221, %s222
      %p226 = pneg %p220
      %p227 = scmp.eq.s32.totalorder %s17, 1
      %p228 = por %p226, %p227
      %p229 = scmp.ne.s32.totalorder %s221, %s224
      %p230 = scmp.eq.s32.totalorder %s17, 0
      %p231 = por %p229, %p230
      %p232 = scmp.ne.s32.totalorder %s221, %s224
      %p233 = scmp.eq.s32.totalorder %s22, 1
      %p234 = por %p232, %p233
      %p235 = scmp.ne.s32.totalorder %s224, %s225
      %p236 = scmp.eq.s32.totalorder %s22, 0
      %p237 = por %p235, %p236
      %p238 = scmp.ne.s32.totalorder %s224, %s225
      %p239 = scmp.eq.s32.totalorder %s23, 1
      %p240 = por %p238, %p239
      %p242 = scmp.ne.s32.totalorder %s225, %s241
      %p243 = scmp.eq.s32.totalorder %s23, 0
      %p244 = por %p242, %p243
      %p245 = scmp.le.s32.totalorder 1, %s17
      %p246 = scmp.lt.s32.totalorder %s17, 3
      %p247 = pnand %p245, %p246
      %p248 = pneg %p247
      // Predicated region
      $region9: #{tpu_custom_call.1} parent=5 // pred_check
        _
      $region10: #{tpu_custom_call.1} parent=5 // pred_check_branch
        %250 = sbr.rel (%p247) target = $region12
      $region11: #{tpu_custom_call.1} parent=5 // pred_region
        %s251 = ssub.s32 %s17, 1
        // Predicated region
        $region13: #{tpu_custom_call.1} parent=11 // pred_check
          %p252 = pneg %p64
        $region14: #{tpu_custom_call.1} parent=11 // pred_check_branch
          %254 = sbr.rel (%p252) target = $region16
        $region15: #{tpu_custom_call.1} parent=11 // pred_region
          %s256 = ssub.s32 128, 128
          %257 = vsyncadd [#allocation3], %s256
          %s258 = sshll.u32 [#allocation2], 4
          %s259 = int_to_ptr.vmem [resolvable:$true] %s258
          %264 = dma.hbm_to_vmem [thread:$0]  %s1, 128, %s259, [#allocation3], 64, 64, 4
        $region16: #{tpu_custom_call.1} parent=11 // pred_fallthru
          _
        // Predicated region
        $region17: #{tpu_custom_call.1} parent=11 // pred_check
          %p265 = pneg %p85
        $region18: #{tpu_custom_call.1} parent=11 // pred_check_branch
          %267 = sbr.rel (%p265) target = $region20
        $region19: #{tpu_custom_call.1} parent=11 // pred_region
          %s269 = ssub.s32 256, 256
          %270 = vsyncadd [#allocation5], %s269
          %s271 = sshll.u32 [#allocation4], 4
          %s272 = int_to_ptr.vmem [resolvable:$true] %s271
          %277 = dma.hbm_to_vmem [thread:$0]  %s2, 256, %s272, [#allocation5], 64, 64, 4
        $region20: #{tpu_custom_call.1} parent=11 // pred_fallthru
          _
        // Predicated region
        $region21: #{tpu_custom_call.1} parent=11 // pred_check
          %p278 = pneg %p106
        $region22: #{tpu_custom_call.1} parent=11 // pred_check_branch
          %280 = sbr.rel (%p278) target = $region24
        $region23: #{tpu_custom_call.1} parent=11 // pred_region
          _
        $region24: #{tpu_custom_call.1} parent=11 // pred_fallthru
          _
        // Predicated region
        $region25: #{tpu_custom_call.1} parent=11 // pred_check
          %p281 = pneg %p127
        $region26: #{tpu_custom_call.1} parent=11 // pred_check_branch
          %283 = sbr.rel (%p281) target = $region28
        $region27: #{tpu_custom_call.1} parent=11 // pred_region
          _
        $region28: #{tpu_custom_call.1} parent=11 // pred_fallthru
          _
        // Predicated region
        $region29: #{tpu_custom_call.1} parent=11 // pred_check
          %p284 = pneg %p148
        $region30: #{tpu_custom_call.1} parent=11 // pred_check_branch
          %286 = sbr.rel (%p284) target = $region32
        $region31: #{tpu_custom_call.1} parent=11 // pred_region
          %s288 = ssub.s32 256, 256
          %289 = vsyncadd [#allocation5], %s288
          %s290 = sshll.u32 [#allocation6], 4
          %s291 = int_to_ptr.vmem [resolvable:$true] %s290
          %296 = dma.hbm_to_vmem [thread:$0]  %s5, 256, %s291, [#allocation5], 64, 64, 4
        $region32: #{tpu_custom_call.1} parent=11 // pred_fallthru
          _
        // Predicated region
        $region33: #{tpu_custom_call.1} parent=11 // pred_check
          %p297 = pneg %p169
        $region34: #{tpu_custom_call.1} parent=11 // pred_check_branch
          %299 = sbr.rel (%p297) target = $region36
        $region35: #{tpu_custom_call.1} parent=11 // pred_region
          _
        $region36: #{tpu_custom_call.1} parent=11 // pred_fallthru
          _
        // Predicated region
        $region37: #{tpu_custom_call.1} parent=11 // pred_check
          %p300 = pneg %p190
        $region38: #{tpu_custom_call.1} parent=11 // pred_check_branch
          %302 = sbr.rel (%p300) target = $region40
        $region39: #{tpu_custom_call.1} parent=11 // pred_region
          _
        $region40: #{tpu_custom_call.1} parent=11 // pred_fallthru
          _
        // Predicated region
        $region41: #{tpu_custom_call.1} parent=11 // pred_check
          %p303 = pneg %p211
        $region42: #{tpu_custom_call.1} parent=11 // pred_check_branch
          %305 = sbr.rel (%p303) target = $region44
        $region43: #{tpu_custom_call.1} parent=11 // pred_region
          _
        $region44: #{tpu_custom_call.1} parent=11 // pred_fallthru
          _
      $region12: #{tpu_custom_call.1} parent=5 // pred_fallthru
        _
      %p306 = scmp.lt.s32.totalorder %s17, 2
      // Predicated region
      $region45: #{tpu_custom_call.1} parent=5 // pred_check
        %p307 = pneg %p306
      $region46: #{tpu_custom_call.1} parent=5 // pred_check_branch
        %309 = sbr.rel (%p307) target = $region48
      $region47: #{tpu_custom_call.1} parent=5 // pred_region
        // Predicated region
        $region49: #{tpu_custom_call.1} parent=47 // pred_check
          %p310 = pneg %p37
        $region50: #{tpu_custom_call.1} parent=47 // pred_check_branch
          %312 = sbr.rel (%p310) target = $region52
        $region51: #{tpu_custom_call.1} parent=47 // pred_region
          %p313 = scmp.lt.s32.totalorder %s17, 1
          %s314 = scalar_select %p313, %s17, 1
          %s315 = smul.addr %s314, 8
          %s316 = scalar_lea.vmem %s0, %s315
        $region52: #{tpu_custom_call.1} parent=47 // pred_fallthru
          _
      $region48: #{tpu_custom_call.1} parent=5 // pred_fallthru
        _
      %p317 = scmp.le.s32.totalorder 1, %s17
      %p318 = scmp.lt.s32.totalorder %s17, 3
      %p319 = pnand %p317, %p318
      %p320 = pneg %p319
      // Predicated region
      $region53: #{tpu_custom_call.1} parent=5 // pred_check
        _
      $region54: #{tpu_custom_call.1} parent=5 // pred_check_branch
        %322 = sbr.rel (%p319) target = $region56
      $region55: #{tpu_custom_call.1} parent=5 // pred_region
        %s323 = ssub.s32 %s17, 1
        // Predicated region
        $region57: #{tpu_custom_call.1} parent=55 // pred_check
          %p324 = pneg %p64
        $region58: #{tpu_custom_call.1} parent=55 // pred_check_branch
          %326 = sbr.rel (%p324) target = $region60
        $region59: #{tpu_custom_call.1} parent=55 // pred_region
          %327 = dma.done [#allocation3], 128
        $region60: #{tpu_custom_call.1} parent=55 // pred_fallthru
          _
        // Predicated region
        $region61: #{tpu_custom_call.1} parent=55 // pred_check
          %p328 = pneg %p85
        $region62: #{tpu_custom_call.1} parent=55 // pred_check_branch
          %330 = sbr.rel (%p328) target = $region64
        $region63: #{tpu_custom_call.1} parent=55 // pred_region
          %331 = dma.done [#allocation5], 256
        $region64: #{tpu_custom_call.1} parent=55 // pred_fallthru
          _
        // Predicated region
        $region65: #{tpu_custom_call.1} parent=55 // pred_check
          %p332 = pneg %p148
        $region66: #{tpu_custom_call.1} parent=55 // pred_check_branch
          %334 = sbr.rel (%p332) target = $region68
        $region67: #{tpu_custom_call.1} parent=55 // pred_region
          %335 = dma.done [#allocation5], 256
        $region68: #{tpu_custom_call.1} parent=55 // pred_fallthru
          _
        %p336 = scmp.lt.s32.totalorder %s22, 1
        %s337 = scalar_select %p336, %s22, 1
        %s338 = smul.addr %s337, 8
        %s339 = scalar_lea.vmem %s0, %s338
        %p340 = pneg %p43
        %p341 = pneg %p40
        %p342 = pneg %p64
        %p343 = pneg %p61
        %p344 = pneg %p85
        %p345 = pneg %p82
        %p346 = pneg %p106
        %p347 = pneg %p103
        %p348 = pneg %p127
        %p349 = pneg %p124
        %p350 = pneg %p148
        %p351 = pneg %p145
        %p352 = pneg %p169
        %p353 = pneg %p166
        %p354 = pneg %p190
        %p355 = pneg %p187
        %p356 = pneg %p211
        %p357 = pneg %p208
        %p358 = pneg %p237
        %p359 = pneg %p234
        %p360 = scmp.lt.s32.totalorder %s22, 1
        %s361 = scalar_select %p360, %s22, 1
        %s362 = smul.addr %s361, 8
        %s363 = scalar_lea.vmem %s9, %s362
        %p364 = scmp.lt.s32.totalorder %s22, 1
        %s365 = scalar_select %p364, %s22, 1
        %s366 = smul.addr %s365, 8
        %s367 = scalar_lea.vmem %s0, %s366
        %p368 = scmp.lt.s32.totalorder %s22, 1
        %s369 = scalar_select %p368, %s22, 1
        %s370 = smul.addr %s369, 8
        %s371 = scalar_lea.vmem %s9, %s370
        %v373 = vld [vmem:[%s367] sm:$0xff]
        %v374 = vpack.c.bf16 %v373, %v373
        %v375 = vld [vmem:[#allocation2] sm:$0xf]
        %v376 = vld [vmem:[#allocation2 + $0x4] sm:$0xf]
        %v377 = vld [vmem:[%s3] sm:$0x1]
        %v379 = vlaneseq
        %v380 = vshrl.u32 %v379, 7
        %v381 = vsub.s32 0, %v380
        %v382 = vrot.slane %v377, %v381
        %v386 = vunpack.c.l.b16 %v375
        %v387 = vunpack.c.l.b16 %v376
        %v388 = vpack.c.b16 %v387, %v386
        %vm390 = vcmask 130048
        %v392 = vsel %vm390, %v374, 0
        %394 = vmatprep.subr.bf16.mxu0 0
        %395 = vmatpush1.bf16.msra.mxu0 %v388
        %396 = vmatprep.subr.bf16.mxu0 0
        %397 = vmatpush1.bf16.msra.mxu0 0
        %398 = vmatprep.subr.bf16.mxu0 0
        %399 = vmatpush1.bf16.msra.mxu0 0
        %400 = vmatprep.subr.bf16.mxu0 0
        %401 = vmatpush1.bf16.msra.mxu0 0
        %402 = vmatprep.subr.bf16.mxu0 0
        %403 = vmatpush1.bf16.msra.mxu0 0
        %404 = vmatprep.subr.bf16.mxu0 0
        %405 = vmatpush1.bf16.msra.mxu0 0
        %406 = vmatprep.subr.bf16.mxu0 0
        %407 = vmatpush1.bf16.msra.mxu0 0
        %408 = vmatprep.subr.bf16.mxu0 0
        %409 = vmatpush1.bf16.msra.mxu0 0
        %410 = vmatprep.subr.bf16.mxu0 0
        %411 = vmatpush1.bf16.msra.mxu0 0
        %412 = vmatprep.subr.bf16.mxu0 0
        %413 = vmatpush1.bf16.msra.mxu0 0
        %414 = vmatprep.subr.bf16.mxu0 0
        %415 = vmatpush1.bf16.msra.mxu0 0
        %416 = vmatprep.subr.bf16.mxu0 0
        %417 = vmatpush1.bf16.msra.mxu0 0
        %418 = vmatprep.subr.bf16.mxu0 0
        %419 = vmatpush1.bf16.msra.mxu0 0
        %420 = vmatprep.subr.bf16.mxu0 0
        %421 = vmatpush1.bf16.msra.mxu0 0
        %422 = vmatprep.subr.bf16.mxu0 0
        %423 = vmatpush1.bf16.msra.mxu0 0
        %424 = vmatprep.subr.bf16.mxu0 0
        %425 = vmatpush1.bf16.msra.mxu0 0
        %426 = vmatprep.mubr.bf16.mxu0 0
        %427 = vmatmul.mubr.bf16.gmra.mrb[0].mxu0 %v392
        %v428 = vpop.f32.mrb[0].mxu0
        %v429 = vadd.f32 %v382, %v428
        %v430 = vpop.f32.mrb[0].mxu0
        %v431 = vpop.f32.mrb[0].mxu0
        %v432 = vpop.f32.mrb[0].mxu0
        %433 = vdwg.mxu0
        %v434 = vld [vmem:[#allocation4] sm:$0xf]
        %v435 = vld [vmem:[#allocation4 + $0x4] sm:$0xf]
        %v436 = vld [vmem:[#allocation4 + $0x8] sm:$0xf]
        %v437 = vld [vmem:[#allocation4 + $0xc] sm:$0xf]
        %v442 = vunpack.c.l.b16 %v434
        %v443 = vunpack.c.l.b16 %v435
        %v444 = vunpack.c.l.b16 %v436
        %v445 = vunpack.c.l.b16 %v437
        %v446 = vpack.c.b16 %v443, %v442
        %v447 = vpack.c.b16 %v445, %v444
        %vm450 = vcmask 261120
        %v452 = vsel %vm450, 0, 0
        %454 = vmatprep.subr.bf16.mxu0 0
        %455 = vmatpush1.bf16.msra.mxu0 %v446
        %456 = vmatprep.subr.bf16.mxu0 0
        %457 = vmatpush1.bf16.msra.mxu0 %v447
        %458 = vmatprep.subr.bf16.mxu0 0
        %459 = vmatpush1.bf16.msra.mxu0 0
        %460 = vmatprep.subr.bf16.mxu0 0
        %461 = vmatpush1.bf16.msra.mxu0 0
        %462 = vmatprep.subr.bf16.mxu0 0
        %463 = vmatpush1.bf16.msra.mxu0 0
        %464 = vmatprep.subr.bf16.mxu0 0
        %465 = vmatpush1.bf16.msra.mxu0 0
        %466 = vmatprep.subr.bf16.mxu0 0
        %467 = vmatpush1.bf16.msra.mxu0 0
        %468 = vmatprep.subr.bf16.mxu0 0
        %469 = vmatpush1.bf16.msra.mxu0 0
        %470 = vmatprep.subr.bf16.mxu0 0
        %471 = vmatpush1.bf16.msra.mxu0 0
        %472 = vmatprep.subr.bf16.mxu0 0
        %473 = vmatpush1.bf16.msra.mxu0 0
        %474 = vmatprep.subr.bf16.mxu0 0
        %475 = vmatpush1.bf16.msra.mxu0 0
        %476 = vmatprep.subr.bf16.mxu0 0
        %477 = vmatpush1.bf16.msra.mxu0 0
        %478 = vmatprep.subr.bf16.mxu0 0
        %479 = vmatpush1.bf16.msra.mxu0 0
        %480 = vmatprep.subr.bf16.mxu0 0
        %481 = vmatpush1.bf16.msra.mxu0 0
        %482 = vmatprep.subr.bf16.mxu0 0
        %483 = vmatpush1.bf16.msra.mxu0 0
        %484 = vmatprep.subr.bf16.mxu0 0
        %485 = vmatpush1.bf16.msra.mxu0 0
        %486 = vmatprep.mubr.bf16.mxu0 0
        %487 = vmatmul.mubr.bf16.gmra.mrb[0].mxu0 %v452
        %v488 = vpop.f32.mrb[0].mxu0
        %v489 = vadd.f32 0.0, %v488
        %v490 = vpop.f32.mrb[0].mxu0
        %v491 = vpop.f32.mrb[0].mxu0
        %v492 = vpop.f32.mrb[0].mxu0
        %493 = vdwg.mxu0
        %v494 = vadd.f32 %v429, %v489
        %v495 = vxor.u32 %v494, 2147483648
        %v496 = vmul.f32 %v495, 1.442695
        %v497 = vpow.pop %v496
        %v498 = vadd.f32 %v497, 1.0
        %v499 = vrcp.pop %v498
        %v500 = vmul.f32 1.0, %v499
        %v501 = vmul.f32 %v500, 2.0
        %v502 = vsub.f32 %v501, 1.0
        %v503 = vmul.f32 %v500, 0.0
        %505 = vrot.lane.b32.xlu0 %v502, 64
        %v506 = vpop.permute.xlu0 %505
        %v508 = vmul.f32 %v500, %v506
        %510 = vrot.lane.b32.xlu0 %v508, 32
        %v511 = vpop.permute.xlu0 %510
        %v513 = vadd.f32 %v503, %v511
        %v514 = vtanh.pop %v513
        %516 = vrot.lane.b32.xlu0 %v514, 64
        %v517 = vpop.permute.xlu0 %516
        %v519 = vmul.f32 %v500, %v517
        %v520 = vpack.c.bf16 %v519, %v519
        %522 = vrot.lane.b32.xlu0 %v520, 32
        %v523 = vpop.permute.xlu0 %522
        %v525 = vsel %vm450, %v523, 0
        %527 = vmatprep.subr.bf16.mxu0 0
        %528 = vmatpush1.bf16.msra.mxu0 %v446
        %529 = vmatprep.subr.bf16.mxu0 0
        %530 = vmatpush1.bf16.msra.mxu0 %v447
        %531 = vmatprep.subr.bf16.mxu0 0
        %532 = vmatpush1.bf16.msra.mxu0 0
        %533 = vmatprep.subr.bf16.mxu0 0
        %534 = vmatpush1.bf16.msra.mxu0 0
        %535 = vmatprep.subr.bf16.mxu0 0
        %536 = vmatpush1.bf16.msra.mxu0 0
        %537 = vmatprep.subr.bf16.mxu0 0
        %538 = vmatpush1.bf16.msra.mxu0 0
        %539 = vmatprep.subr.bf16.mxu0 0
        %540 = vmatpush1.bf16.msra.mxu0 0
        %541 = vmatprep.subr.bf16.mxu0 0
        %542 = vmatpush1.bf16.msra.mxu0 0
        %543 = vmatprep.subr.bf16.mxu0 0
        %544 = vmatpush1.bf16.msra.mxu0 0
        %545 = vmatprep.subr.bf16.mxu0 0
        %546 = vmatpush1.bf16.msra.mxu0 0
        %547 = vmatprep.subr.bf16.mxu0 0
        %548 = vmatpush1.bf16.msra.mxu0 0
        %549 = vmatprep.subr.bf16.mxu0 0
        %550 = vmatpush1.bf16.msra.mxu0 0
        %551 = vmatprep.subr.bf16.mxu0 0
        %552 = vmatpush1.bf16.msra.mxu0 0
        %553 = vmatprep.subr.bf16.mxu0 0
        %554 = vmatpush1.bf16.msra.mxu0 0
        %555 = vmatprep.subr.bf16.mxu0 0
        %556 = vmatpush1.bf16.msra.mxu0 0
        %557 = vmatprep.subr.bf16.mxu0 0
        %558 = vmatpush1.bf16.msra.mxu0 0
        %559 = vmatprep.mubr.bf16.mxu0 0
        %560 = vmatmul.mubr.bf16.gmra.mrb[0].mxu0 %v525
        %v561 = vpop.f32.mrb[0].mxu0
        %v562 = vadd.f32 0.0, %v561
        %v563 = vpop.f32.mrb[0].mxu0
        %v564 = vpop.f32.mrb[0].mxu0
        %v565 = vpop.f32.mrb[0].mxu0
        %566 = vdwg.mxu0
        %v568 = vrot.slane %v562, 7
        %v570 = vadd.f32 %v429, %v568
        %v571 = vxor.u32 %v570, 2147483648
        %v572 = vmul.f32 %v571, 1.442695
        %v573 = vpow.pop %v572
        %v574 = vadd.f32 %v573, 1.0
        %v575 = vrcp.pop %v574
        %v576 = vmul.f32 1.0, %v575
        %v577 = vmul.f32 %v576, 2.0
        %v578 = vsub.f32 %v577, 1.0
        %v580 = vrot.slane %v513, 7
        %v582 = vmul.f32 %v576, %v580
        %584 = vrot.lane.b32.xlu0 %v578, 64
        %v585 = vpop.permute.xlu0 %584
        %v587 = vmul.f32 %v576, %v585
        %589 = vrot.lane.b32.xlu0 %v587, 32
        %v590 = vpop.permute.xlu0 %589
        %v592 = vadd.f32 %v582, %v590
        %v593 = vtanh.pop %v592
        %595 = vrot.lane.b32.xlu0 %v593, 64
        %v596 = vpop.permute.xlu0 %595
        %v598 = vmul.f32 %v576, %v596
        %v599 = vpack.c.bf16 %v598, %v598
        %v601 = vshrl.u32 %v599, 16
        %603 = vrot.lane.b32.xlu0 %v601, 32
        %v604 = vpop.permute.xlu0 %603
        %v606 = vsel %vm450, %v604, 0
        %608 = vmatprep.subr.bf16.mxu0 0
        %609 = vmatpush1.bf16.msra.mxu0 %v446
        %610 = vmatprep.subr.bf16.mxu0 0
        %611 = vmatpush1.bf16.msra.mxu0 %v447
        %612 = vmatprep.subr.bf16.mxu0 0
        %613 = vmatpush1.bf16.msra.mxu0 0
        %614 = vmatprep.subr.bf16.mxu0 0
        %615 = vmatpush1.bf16.msra.mxu0 0
        %616 = vmatprep.subr.bf16.mxu0 0
        %617 = vmatpush1.bf16.msra.mxu0 0
        %618 = vmatprep.subr.bf16.mxu0 0
        %619 = vmatpush1.bf16.msra.mxu0 0
        %620 = vmatprep.subr.bf16.mxu0 0
        %621 = vmatpush1.bf16.msra.mxu0 0
        %622 = vmatprep.subr.bf16.mxu0 0
        %623 = vmatpush1.bf16.msra.mxu0 0
        %624 = vmatprep.subr.bf16.mxu0 0
        %625 = vmatpush1.bf16.msra.mxu0 0
        %626 = vmatprep.subr.bf16.mxu0 0
        %627 = vmatpush1.bf16.msra.mxu0 0
        %628 = vmatprep.subr.bf16.mxu0 0
        %629 = vmatpush1.bf16.msra.mxu0 0
        %630 = vmatprep.subr.bf16.mxu0 0
        %631 = vmatpush1.bf16.msra.mxu0 0
        %632 = vmatprep.subr.bf16.mxu0 0
        %633 = vmatpush1.bf16.msra.mxu0 0
        %634 = vmatprep.subr.bf16.mxu0 0
        %635 = vmatpush1.bf16.msra.mxu0 0
        %636 = vmatprep.subr.bf16.mxu0 0
        %637 = vmatpush1.bf16.msra.mxu0 0
        %638 = vmatprep.subr.bf16.mxu0 0
        %639 = vmatpush1.bf16.msra.mxu0 0
        %640 = vmatprep.mubr.bf16.mxu0 0
        %641 = vmatmul.mubr.bf16.gmra.mrb[0].mxu0 %v606
        %v642 = vpop.f32.mrb[0].mxu0
        %v643 = vadd.f32 0.0, %v642
        %v644 = vpop.f32.mrb[0].mxu0
        %v645 = vpop.f32.mrb[0].mxu0
        %v646 = vpop.f32.mrb[0].mxu0
        %647 = vdwg.mxu0
        %v649 = vrot.slane %v643, 6
        %v651 = vadd.f32 %v429, %v649
        %v652 = vxor.u32 %v651, 2147483648
        %v653 = vmul.f32 %v652, 1.442695
        %v654 = vpow.pop %v653
        %v655 = vadd.f32 %v654, 1.0
        %v656 = vrcp.pop %v655
        %v657 = vmul.f32 1.0, %v656
        %v658 = vmul.f32 %v657, 2.0
        %v659 = vsub.f32 %v658, 1.0
        %v661 = vrot.slane %v592, 7
        %v663 = vmul.f32 %v657, %v661
        %665 = vrot.lane.b32.xlu0 %v659, 64
        %v666 = vpop.permute.xlu0 %665
        %v668 = vmul.f32 %v657, %v666
        %670 = vrot.lane.b32.xlu0 %v668, 32
        %v671 = vpop.permute.xlu0 %670
        %v673 = vadd.f32 %v663, %v671
        %v674 = vtanh.pop %v673
        %676 = vrot.lane.b32.xlu0 %v674, 64
        %v677 = vpop.permute.xlu0 %676
        %v679 = vmul.f32 %v657, %v677
        %v680 = vpack.c.bf16 %v679, %v679
        %v682 = vrot.slane %v680, 1
        %683 = vrot.lane.b32.xlu0 %v682, 32
        %v684 = vpop.permute.xlu0 %683
        %v686 = vsel %vm450, %v684, 0
        %688 = vmatprep.subr.bf16.mxu0 0
        %689 = vmatpush1.bf16.msra.mxu0 %v446
        %690 = vmatprep.subr.bf16.mxu0 0
        %691 = vmatpush1.bf16.msra.mxu0 %v447
        %692 = vmatprep.subr.bf16.mxu0 0
        %693 = vmatpush1.bf16.msra.mxu0 0
        %694 = vmatprep.subr.bf16.mxu0 0
        %695 = vmatpush1.bf16.msra.mxu0 0
        %696 = vmatprep.subr.bf16.mxu0 0
        %697 = vmatpush1.bf16.msra.mxu0 0
        %698 = vmatprep.subr.bf16.mxu0 0
        %699 = vmatpush1.bf16.msra.mxu0 0
        %700 = vmatprep.subr.bf16.mxu0 0
        %701 = vmatpush1.bf16.msra.mxu0 0
        %702 = vmatprep.subr.bf16.mxu0 0
        %703 = vmatpush1.bf16.msra.mxu0 0
        %704 = vmatprep.subr.bf16.mxu0 0
        %705 = vmatpush1.bf16.msra.mxu0 0
        %706 = vmatprep.subr.bf16.mxu0 0
        %707 = vmatpush1.bf16.msra.mxu0 0
        %708 = vmatprep.subr.bf16.mxu0 0
        %709 = vmatpush1.bf16.msra.mxu0 0
        %710 = vmatprep.subr.bf16.mxu0 0
        %711 = vmatpush1.bf16.msra.mxu0 0
        %712 = vmatprep.subr.bf16.mxu0 0
        %713 = vmatpush1.bf16.msra.mxu0 0
        %714 = vmatprep.subr.bf16.mxu0 0
        %715 = vmatpush1.bf16.msra.mxu0 0
        %716 = vmatprep.subr.bf16.mxu0 0
        %717 = vmatpush1.bf16.msra.mxu0 0
        %718 = vmatprep.subr.bf16.mxu0 0
        %719 = vmatpush1.bf16.msra.mxu0 0
        %720 = vmatprep.mubr.bf16.mxu0 0
        %721 = vmatmul.mubr.bf16.gmra.mrb[0].mxu0 %v686
        %v722 = vpop.f32.mrb[0].mxu0
        %v723 = vadd.f32 0.0, %v722
        %v724 = vpop.f32.mrb[0].mxu0
        %v725 = vpop.f32.mrb[0].mxu0
        %v726 = vpop.f32.mrb[0].mxu0
        %727 = vdwg.mxu0
        %v729 = vrot.slane %v723, 5
        %v731 = vadd.f32 %v429, %v729
        %v732 = vxor.u32 %v731, 2147483648
        %v733 = vmul.f32 %v732, 1.442695
        %v734 = vpow.pop %v733
        %v735 = vadd.f32 %v734, 1.0
        %v736 = vrcp.pop %v735
        %v737 = vmul.f32 1.0, %v736
        %v738 = vmul.f32 %v737, 2.0
        %v739 = vsub.f32 %v738, 1.0
        %v741 = vrot.slane %v673, 7
        %v743 = vmul.f32 %v737, %v741
        %745 = vrot.lane.b32.xlu0 %v739, 64
        %v746 = vpop.permute.xlu0 %745
        %v748 = vmul.f32 %v737, %v746
        %750 = vrot.lane.b32.xlu0 %v748, 32
        %v751 = vpop.permute.xlu0 %750
        %v753 = vadd.f32 %v743, %v751
        %v754 = vtanh.pop %v753
        %756 = vrot.lane.b32.xlu0 %v754, 64
        %v757 = vpop.permute.xlu0 %756
        %v759 = vmul.f32 %v737, %v757
        %v760 = vpack.c.bf16 %v759, %v759
        %v762 = vshrl.u32 %v760, 16
        %v764 = vrot.slane %v762, 1
        %765 = vrot.lane.b32.xlu0 %v764, 32
        %v766 = vpop.permute.xlu0 %765
        %v768 = vsel %vm450, %v766, 0
        %770 = vmatprep.subr.bf16.mxu0 0
        %771 = vmatpush1.bf16.msra.mxu0 %v446
        %772 = vmatprep.subr.bf16.mxu0 0
        %773 = vmatpush1.bf16.msra.mxu0 %v447
        %774 = vmatprep.subr.bf16.mxu0 0
        %775 = vmatpush1.bf16.msra.mxu0 0
        %776 = vmatprep.subr.bf16.mxu0 0
        %777 = vmatpush1.bf16.msra.mxu0 0
        %778 = vmatprep.subr.bf16.mxu0 0
        %779 = vmatpush1.bf16.msra.mxu0 0
        %780 = vmatprep.subr.bf16.mxu0 0
        %781 = vmatpush1.bf16.msra.mxu0 0
        %782 = vmatprep.subr.bf16.mxu0 0
        %783 = vmatpush1.bf16.msra.mxu0 0
        %784 = vmatprep.subr.bf16.mxu0 0
        %785 = vmatpush1.bf16.msra.mxu0 0
        %786 = vmatprep.subr.bf16.mxu0 0
        %787 = vmatpush1.bf16.msra.mxu0 0
        %788 = vmatprep.subr.bf16.mxu0 0
        %789 = vmatpush1.bf16.msra.mxu0 0
        %790 = vmatprep.subr.bf16.mxu0 0
        %791 = vmatpush1.bf16.msra.mxu0 0
        %792 = vmatprep.subr.bf16.mxu0 0
        %793 = vmatpush1.bf16.msra.mxu0 0
        %794 = vmatprep.subr.bf16.mxu0 0
        %795 = vmatpush1.bf16.msra.mxu0 0
        %796 = vmatprep.subr.bf16.mxu0 0
        %797 = vmatpush1.bf16.msra.mxu0 0
        %798 = vmatprep.subr.bf16.mxu0 0
        %799 = vmatpush1.bf16.msra.mxu0 0
        %800 = vmatprep.subr.bf16.mxu0 0
        %801 = vmatpush1.bf16.msra.mxu0 0
        %802 = vmatprep.mubr.bf16.mxu0 0
        %803 = vmatmul.mubr.bf16.gmra.mrb[0].mxu0 %v768
        %v804 = vpop.f32.mrb[0].mxu0
        %v805 = vadd.f32 0.0, %v804
        %v806 = vpop.f32.mrb[0].mxu0
        %v807 = vpop.f32.mrb[0].mxu0
        %v808 = vpop.f32.mrb[0].mxu0
        %809 = vdwg.mxu0
        %v811 = vrot.slane %v805, 4
        %v813 = vadd.f32 %v429, %v811
        %v814 = vxor.u32 %v813, 2147483648
        %v815 = vmul.f32 %v814, 1.442695
        %v816 = vpow.pop %v815
        %v817 = vadd.f32 %v816, 1.0
        %v818 = vrcp.pop %v817
        %v819 = vmul.f32 1.0, %v818
        %v820 = vmul.f32 %v819, 2.0
        %v821 = vsub.f32 %v820, 1.0
        %v823 = vrot.slane %v753, 7
        %v825 = vmul.f32 %v819, %v823
        %827 = vrot.lane.b32.xlu0 %v821, 64
        %v828 = vpop.permute.xlu0 %827
        %v830 = vmul.f32 %v819, %v828
        %832 = vrot.lane.b32.xlu0 %v830, 32
        %v833 = vpop.permute.xlu0 %832
        %v835 = vadd.f32 %v825, %v833
        %v836 = vtanh.pop %v835
        %838 = vrot.lane.b32.xlu0 %v836, 64
        %v839 = vpop.permute.xlu0 %838
        %v841 = vmul.f32 %v819, %v839
        %v842 = vpack.c.bf16 %v841, %v841
        %v844 = vrot.slane %v842, 2
        %845 = vrot.lane.b32.xlu0 %v844, 32
        %v846 = vpop.permute.xlu0 %845
        %v848 = vsel %vm450, %v846, 0
        %850 = vmatprep.subr.bf16.mxu0 0
        %851 = vmatpush1.bf16.msra.mxu0 %v446
        %852 = vmatprep.subr.bf16.mxu0 0
        %853 = vmatpush1.bf16.msra.mxu0 %v447
        %854 = vmatprep.subr.bf16.mxu0 0
        %855 = vmatpush1.bf16.msra.mxu0 0
        %856 = vmatprep.subr.bf16.mxu0 0
        %857 = vmatpush1.bf16.msra.mxu0 0
        %858 = vmatprep.subr.bf16.mxu0 0
        %859 = vmatpush1.bf16.msra.mxu0 0
        %860 = vmatprep.subr.bf16.mxu0 0
        %861 = vmatpush1.bf16.msra.mxu0 0
        %862 = vmatprep.subr.bf16.mxu0 0
        %863 = vmatpush1.bf16.msra.mxu0 0
        %864 = vmatprep.subr.bf16.mxu0 0
        %865 = vmatpush1.bf16.msra.mxu0 0
        %866 = vmatprep.subr.bf16.mxu0 0
        %867 = vmatpush1.bf16.msra.mxu0 0
        %868 = vmatprep.subr.bf16.mxu0 0
        %869 = vmatpush1.bf16.msra.mxu0 0
        %870 = vmatprep.subr.bf16.mxu0 0
        %871 = vmatpush1.bf16.msra.mxu0 0
        %872 = vmatprep.subr.bf16.mxu0 0
        %873 = vmatpush1.bf16.msra.mxu0 0
        %874 = vmatprep.subr.bf16.mxu0 0
        %875 = vmatpush1.bf16.msra.mxu0 0
        %876 = vmatprep.subr.bf16.mxu0 0
        %877 = vmatpush1.bf16.msra.mxu0 0
        %878 = vmatprep.subr.bf16.mxu0 0
        %879 = vmatpush1.bf16.msra.mxu0 0
        %880 = vmatprep.subr.bf16.mxu0 0
        %881 = vmatpush1.bf16.msra.mxu0 0
        %882 = vmatprep.mubr.bf16.mxu0 0
        %883 = vmatmul.mubr.bf16.gmra.mrb[0].mxu0 %v848
        %v884 = vpop.f32.mrb[0].mxu0
        %v885 = vadd.f32 0.0, %v884
        %v886 = vpop.f32.mrb[0].mxu0
        %v887 = vpop.f32.mrb[0].mxu0
        %v888 = vpop.f32.mrb[0].mxu0
        %889 = vdwg.mxu0
        %v891 = vrot.slane %v885, 3
        %v893 = vadd.f32 %v429, %v891
        %v894 = vxor.u32 %v893, 2147483648
        %v895 = vmul.f32 %v894, 1.442695
        %v896 = vpow.pop %v895
        %v897 = vadd.f32 %v896, 1.0
        %v898 = vrcp.pop %v897
        %v899 = vmul.f32 1.0, %v898
        %v900 = vmul.f32 %v899, 2.0
        %v901 = vsub.f32 %v900, 1.0
        %v903 = vrot.slane %v835, 7
        %v905 = vmul.f32 %v899, %v903
        %907 = vrot.lane.b32.xlu0 %v901, 64
        %v908 = vpop.permute.xlu0 %907
        %v910 = vmul.f32 %v899, %v908
        %912 = vrot.lane.b32.xlu0 %v910, 32
        %v913 = vpop.permute.xlu0 %912
        %v915 = vadd.f32 %v905, %v913
        %v916 = vtanh.pop %v915
        %918 = vrot.lane.b32.xlu0 %v916, 64
        %v919 = vpop.permute.xlu0 %918
        %v921 = vmul.f32 %v899, %v919
        %v922 = vpack.c.bf16 %v921, %v921
        %v924 = vshrl.u32 %v922, 16
        %v926 = vrot.slane %v924, 2
        %927 = vrot.lane.b32.xlu0 %v926, 32
        %v928 = vpop.permute.xlu0 %927
        %v930 = vsel %vm450, %v928, 0
        %932 = vmatprep.subr.bf16.mxu0 0
        %933 = vmatpush1.bf16.msra.mxu0 %v446
        %934 = vmatprep.subr.bf16.mxu0 0
        %935 = vmatpush1.bf16.msra.mxu0 %v447
        %936 = vmatprep.subr.bf16.mxu0 0
        %937 = vmatpush1.bf16.msra.mxu0 0
        %938 = vmatprep.subr.bf16.mxu0 0
        %939 = vmatpush1.bf16.msra.mxu0 0
        %940 = vmatprep.subr.bf16.mxu0 0
        %941 = vmatpush1.bf16.msra.mxu0 0
        %942 = vmatprep.subr.bf16.mxu0 0
        %943 = vmatpush1.bf16.msra.mxu0 0
        %944 = vmatprep.subr.bf16.mxu0 0
        %945 = vmatpush1.bf16.msra.mxu0 0
        %946 = vmatprep.subr.bf16.mxu0 0
        %947 = vmatpush1.bf16.msra.mxu0 0
        %948 = vmatprep.subr.bf16.mxu0 0
        %949 = vmatpush1.bf16.msra.mxu0 0
        %950 = vmatprep.subr.bf16.mxu0 0
        %951 = vmatpush1.bf16.msra.mxu0 0
        %952 = vmatprep.subr.bf16.mxu0 0
        %953 = vmatpush1.bf16.msra.mxu0 0
        %954 = vmatprep.subr.bf16.mxu0 0
        %955 = vmatpush1.bf16.msra.mxu0 0
        %956 = vmatprep.subr.bf16.mxu0 0
        %957 = vmatpush1.bf16.msra.mxu0 0
        %958 = vmatprep.subr.bf16.mxu0 0
        %959 = vmatpush1.bf16.msra.mxu0 0
        %960 = vmatprep.subr.bf16.mxu0 0
        %961 = vmatpush1.bf16.msra.mxu0 0
        %962 = vmatprep.subr.bf16.mxu0 0
        %963 = vmatpush1.bf16.msra.mxu0 0
        %964 = vmatprep.mubr.bf16.mxu0 0
        %965 = vmatmul.mubr.bf16.gmra.mrb[0].mxu0 %v930
        %v966 = vpop.f32.mrb[0].mxu0
        %v967 = vadd.f32 0.0, %v966
        %v968 = vpop.f32.mrb[0].mxu0
        %v969 = vpop.f32.mrb[0].mxu0
        %v970 = vpop.f32.mrb[0].mxu0
        %971 = vdwg.mxu0
        %v973 = vrot.slane %v967, 2
        %v975 = vadd.f32 %v429, %v973
        %v976 = vxor.u32 %v975, 2147483648
        %v977 = vmul.f32 %v976, 1.442695
        %v978 = vpow.pop %v977
        %v979 = vadd.f32 %v978, 1.0
        %v980 = vrcp.pop %v979
        %v981 = vmul.f32 1.0, %v980
        %v982 = vmul.f32 %v981, 2.0
        %v983 = vsub.f32 %v982, 1.0
        %v985 = vrot.slane %v915, 7
        %v987 = vmul.f32 %v981, %v985
        %989 = vrot.lane.b32.xlu0 %v983, 64
        %v990 = vpop.permute.xlu0 %989
        %v992 = vmul.f32 %v981, %v990
        %994 = vrot.lane.b32.xlu0 %v992, 32
        %v995 = vpop.permute.xlu0 %994
        %v997 = vadd.f32 %v987, %v995
        %v998 = vtanh.pop %v997
        %1000 = vrot.lane.b32.xlu0 %v998, 64
        %v1001 = vpop.permute.xlu0 %1000
        %v1003 = vmul.f32 %v981, %v1001
        %v1004 = vpack.c.bf16 %v1003, %v1003
        %v1006 = vrot.slane %v1004, 3
        %1007 = vrot.lane.b32.xlu0 %v1006, 32
        %v1008 = vpop.permute.xlu0 %1007
        %v1010 = vsel %vm450, %v1008, 0
        %1012 = vmatprep.subr.bf16.mxu0 0
        %1013 = vmatpush1.bf16.msra.mxu0 %v446
        %1014 = vmatprep.subr.bf16.mxu0 0
        %1015 = vmatpush1.bf16.msra.mxu0 %v447
        %1016 = vmatprep.subr.bf16.mxu0 0
        %1017 = vmatpush1.bf16.msra.mxu0 0
        %1018 = vmatprep.subr.bf16.mxu0 0
        %1019 = vmatpush1.bf16.msra.mxu0 0
        %1020 = vmatprep.subr.bf16.mxu0 0
        %1021 = vmatpush1.bf16.msra.mxu0 0
        %1022 = vmatprep.subr.bf16.mxu0 0
        %1023 = vmatpush1.bf16.msra.mxu0 0
        %1024 = vmatprep.subr.bf16.mxu0 0
        %1025 = vmatpush1.bf16.msra.mxu0 0
        %1026 = vmatprep.subr.bf16.mxu0 0
        %1027 = vmatpush1.bf16.msra.mxu0 0
        %1028 = vmatprep.subr.bf16.mxu0 0
        %1029 = vmatpush1.bf16.msra.mxu0 0
        %1030 = vmatprep.subr.bf16.mxu0 0
        %1031 = vmatpush1.bf16.msra.mxu0 0
        %1032 = vmatprep.subr.bf16.mxu0 0
        %1033 = vmatpush1.bf16.msra.mxu0 0
        %1034 = vmatprep.subr.bf16.mxu0 0
        %1035 = vmatpush1.bf16.msra.mxu0 0
        %1036 = vmatprep.subr.bf16.mxu0 0
        %1037 = vmatpush1.bf16.msra.mxu0 0
        %1038 = vmatprep.subr.bf16.mxu0 0
        %1039 = vmatpush1.bf16.msra.mxu0 0
        %1040 = vmatprep.subr.bf16.mxu0 0
        %1041 = vmatpush1.bf16.msra.mxu0 0
        %1042 = vmatprep.subr.bf16.mxu0 0
        %1043 = vmatpush1.bf16.msra.mxu0 0
        %1044 = vmatprep.mubr.bf16.mxu0 0
        %1045 = vmatmul.mubr.bf16.gmra.mrb[0].mxu0 %v1010
        %v1046 = vpop.f32.mrb[0].mxu0
        %v1047 = vadd.f32 0.0, %v1046
        %v1048 = vpop.f32.mrb[0].mxu0
        %v1049 = vpop.f32.mrb[0].mxu0
        %v1050 = vpop.f32.mrb[0].mxu0
        %1051 = vdwg.mxu0
        %v1053 = vrot.slane %v1047, 1
        %v1055 = vadd.f32 %v429, %v1053
        %v1056 = vxor.u32 %v1055, 2147483648
        %v1057 = vmul.f32 %v1056, 1.442695
        %v1058 = vpow.pop %v1057
        %v1059 = vadd.f32 %v1058, 1.0
        %v1060 = vrcp.pop %v1059
        %v1061 = vmul.f32 1.0, %v1060
        %v1062 = vmul.f32 %v1061, 2.0
        %v1063 = vsub.f32 %v1062, 1.0
        %v1065 = vrot.slane %v997, 7
        %v1067 = vmul.f32 %v1061, %v1065
        %1069 = vrot.lane.b32.xlu0 %v1063, 64
        %v1070 = vpop.permute.xlu0 %1069
        %v1072 = vmul.f32 %v1061, %v1070
        %1074 = vrot.lane.b32.xlu0 %v1072, 32
        %v1075 = vpop.permute.xlu0 %1074
        %v1077 = vadd.f32 %v1067, %v1075
        %v1078 = vtanh.pop %v1077
        %1080 = vrot.lane.b32.xlu0 %v1078, 64
        %v1081 = vpop.permute.xlu0 %1080
        %v1083 = vmul.f32 %v1061, %v1081
        %vm1084 = vcmask 1040384
        %v1085 = vsel %vm1084, %v519, %v598
        %vm1086 = vcmask 1041408
        %v1087 = vsel %vm1086, %v1085, %v679
        %vm1088 = vcmask 1042432
        %v1089 = vsel %vm1088, %v1087, %v759
        %vm1090 = vcmask 1043456
        %v1091 = vsel %vm1090, %v1089, %v841
        %vm1092 = vcmask 1044480
        %v1093 = vsel %vm1092, %v1091, %v921
        %vm1094 = vcmask 1045504
        %v1095 = vsel %vm1094, %v1093, %v1003
        %vm1096 = vcmask 1046528
        %v1097 = vsel %vm1096, %v1095, %v1083
        %v1098 = vpack.c.bf16 %v1097, %v1097
        %v1099 = vld [vmem:[%s4] sm:$0xf]
        %v1100 = vld [vmem:[%s4 + $0x4] sm:$0xf]
        %v1101 = vld [vmem:[%s4 + $0x8] sm:$0xf]
        %v1102 = vld [vmem:[%s4 + $0xc] sm:$0xf]
        %v1103 = vld [vmem:[%s6] sm:$0x1]
        %v1105 = vlaneseq
        %v1106 = vshrl.u32 %v1105, 7
        %v1107 = vsub.s32 0, %v1106
        %v1108 = vrot.slane %v1103, %v1107
        %1111 = vrot.lane.b32.xlu0 %v1098, 32
        %v1112 = vpop.permute.xlu0 %1111
        %v1117 = vunpack.c.l.b16 %v1099
        %v1118 = vunpack.c.l.b16 %v1100
        %v1119 = vunpack.c.l.b16 %v1101
        %v1120 = vunpack.c.l.b16 %v1102
        %v1121 = vpack.c.b16 %v1118, %v1117
        %v1122 = vpack.c.b16 %v1120, %v1119
        %v1126 = vsel %vm450, %v1112, 0
        %1128 = vmatprep.subr.bf16.mxu0 0
        %1129 = vmatpush1.bf16.msra.mxu0 %v1121
        %1130 = vmatprep.subr.bf16.mxu0 0
        %1131 = vmatpush1.bf16.msra.mxu0 %v1122
        %1132 = vmatprep.subr.bf16.mxu0 0
        %1133 = vmatpush1.bf16.msra.mxu0 0
        %1134 = vmatprep.subr.bf16.mxu0 0
        %1135 = vmatpush1.bf16.msra.mxu0 0
        %1136 = vmatprep.subr.bf16.mxu0 0
        %1137 = vmatpush1.bf16.msra.mxu0 0
        %1138 = vmatprep.subr.bf16.mxu0 0
        %1139 = vmatpush1.bf16.msra.mxu0 0
        %1140 = vmatprep.subr.bf16.mxu0 0
        %1141 = vmatpush1.bf16.msra.mxu0 0
        %1142 = vmatprep.subr.bf16.mxu0 0
        %1143 = vmatpush1.bf16.msra.mxu0 0
        %1144 = vmatprep.subr.bf16.mxu0 0
        %1145 = vmatpush1.bf16.msra.mxu0 0
        %1146 = vmatprep.subr.bf16.mxu0 0
        %1147 = vmatpush1.bf16.msra.mxu0 0
        %1148 = vmatprep.subr.bf16.mxu0 0
        %1149 = vmatpush1.bf16.msra.mxu0 0
        %1150 = vmatprep.subr.bf16.mxu0 0
        %1151 = vmatpush1.bf16.msra.mxu0 0
        %1152 = vmatprep.subr.bf16.mxu0 0
        %1153 = vmatpush1.bf16.msra.mxu0 0
        %1154 = vmatprep.subr.bf16.mxu0 0
        %1155 = vmatpush1.bf16.msra.mxu0 0
        %1156 = vmatprep.subr.bf16.mxu0 0
        %1157 = vmatpush1.bf16.msra.mxu0 0
        %1158 = vmatprep.subr.bf16.mxu0 0
        %1159 = vmatpush1.bf16.msra.mxu0 0
        %1160 = vmatprep.mubr.bf16.mxu0 0
        %1161 = vmatmul.mubr.bf16.gmra.mrb[0].mxu0 %v1126
        %v1162 = vpop.f32.mrb[0].mxu0
        %v1163 = vadd.f32 %v1108, %v1162
        %v1164 = vpop.f32.mrb[0].mxu0
        %v1165 = vpop.f32.mrb[0].mxu0
        %v1166 = vpop.f32.mrb[0].mxu0
        %1167 = vdwg.mxu0
        %v1168 = vld [vmem:[#allocation6] sm:$0xf]
        %v1169 = vld [vmem:[#allocation6 + $0x4] sm:$0xf]
        %v1170 = vld [vmem:[#allocation6 + $0x8] sm:$0xf]
        %v1171 = vld [vmem:[#allocation6 + $0xc] sm:$0xf]
        %v1176 = vunpack.c.l.b16 %v1168
        %v1177 = vunpack.c.l.b16 %v1169
        %v1178 = vunpack.c.l.b16 %v1170
        %v1179 = vunpack.c.l.b16 %v1171
        %v1180 = vpack.c.b16 %v1177, %v1176
        %v1181 = vpack.c.b16 %v1179, %v1178
        %1184 = vmatprep.subr.bf16.mxu0 0
        %1185 = vmatpush1.bf16.msra.mxu0 %v1180
        %1186 = vmatprep.subr.bf16.mxu0 0
        %1187 = vmatpush1.bf16.msra.mxu0 %v1181
        %1188 = vmatprep.subr.bf16.mxu0 0
        %1189 = vmatpush1.bf16.msra.mxu0 0
        %1190 = vmatprep.subr.bf16.mxu0 0
        %1191 = vmatpush1.bf16.msra.mxu0 0
        %1192 = vmatprep.subr.bf16.mxu0 0
        %1193 = vmatpush1.bf16.msra.mxu0 0
        %1194 = vmatprep.subr.bf16.mxu0 0
        %1195 = vmatpush1.bf16.msra.mxu0 0
        %1196 = vmatprep.subr.bf16.mxu0 0
        %1197 = vmatpush1.bf16.msra.mxu0 0
        %1198 = vmatprep.subr.bf16.mxu0 0
        %1199 = vmatpush1.bf16.msra.mxu0 0
        %1200 = vmatprep.subr.bf16.mxu0 0
        %1201 = vmatpush1.bf16.msra.mxu0 0
        %1202 = vmatprep.subr.bf16.mxu0 0
        %1203 = vmatpush1.bf16.msra.mxu0 0
        %1204 = vmatprep.subr.bf16.mxu0 0
        %1205 = vmatpush1.bf16.msra.mxu0 0
        %1206 = vmatprep.subr.bf16.mxu0 0
        %1207 = vmatpush1.bf16.msra.mxu0 0
        %1208 = vmatprep.subr.bf16.mxu0 0
        %1209 = vmatpush1.bf16.msra.mxu0 0
        %1210 = vmatprep.subr.bf16.mxu0 0
        %1211 = vmatpush1.bf16.msra.mxu0 0
        %1212 = vmatprep.subr.bf16.mxu0 0
        %1213 = vmatpush1.bf16.msra.mxu0 0
        %1214 = vmatprep.subr.bf16.mxu0 0
        %1215 = vmatpush1.bf16.msra.mxu0 0
        %1216 = vmatprep.mubr.bf16.mxu0 0
        %1217 = vmatmul.mubr.bf16.gmra.mrb[0].mxu0 %v452
        %v1218 = vpop.f32.mrb[0].mxu0
        %v1219 = vadd.f32 0.0, %v1218
        %v1220 = vpop.f32.mrb[0].mxu0
        %v1221 = vpop.f32.mrb[0].mxu0
        %v1222 = vpop.f32.mrb[0].mxu0
        %1223 = vdwg.mxu0
        %v1224 = vadd.f32 %v1163, %v1219
        %v1225 = vxor.u32 %v1224, 2147483648
        %v1226 = vmul.f32 %v1225, 1.442695
        %v1227 = vpow.pop %v1226
        %v1228 = vadd.f32 %v1227, 1.0
        %v1229 = vrcp.pop %v1228
        %v1230 = vmul.f32 1.0, %v1229
        %v1231 = vmul.f32 %v1230, 2.0
        %v1232 = vsub.f32 %v1231, 1.0
        %v1233 = vmul.f32 %v1230, 0.0
        %1235 = vrot.lane.b32.xlu0 %v1232, 64
        %v1236 = vpop.permute.xlu0 %1235
        %v1238 = vmul.f32 %v1230, %v1236
        %1240 = vrot.lane.b32.xlu0 %v1238, 32
        %v1241 = vpop.permute.xlu0 %1240
        %v1243 = vadd.f32 %v1233, %v1241
        %v1244 = vtanh.pop %v1243
        %1246 = vrot.lane.b32.xlu0 %v1244, 64
        %v1247 = vpop.permute.xlu0 %1246
        %v1249 = vmul.f32 %v1230, %v1247
        %v1250 = vpack.c.bf16 %v1249, %v1249
        %1252 = vrot.lane.b32.xlu0 %v1250, 32
        %v1253 = vpop.permute.xlu0 %1252
        %v1255 = vsel %vm450, %v1253, 0
        %1257 = vmatprep.subr.bf16.mxu0 0
        %1258 = vmatpush1.bf16.msra.mxu0 %v1180
        %1259 = vmatprep.subr.bf16.mxu0 0
        %1260 = vmatpush1.bf16.msra.mxu0 %v1181
        %1261 = vmatprep.subr.bf16.mxu0 0
        %1262 = vmatpush1.bf16.msra.mxu0 0
        %1263 = vmatprep.subr.bf16.mxu0 0
        %1264 = vmatpush1.bf16.msra.mxu0 0
        %1265 = vmatprep.subr.bf16.mxu0 0
        %1266 = vmatpush1.bf16.msra.mxu0 0
        %1267 = vmatprep.subr.bf16.mxu0 0
        %1268 = vmatpush1.bf16.msra.mxu0 0
        %1269 = vmatprep.subr.bf16.mxu0 0
        %1270 = vmatpush1.bf16.msra.mxu0 0
        %1271 = vmatprep.subr.bf16.mxu0 0
        %1272 = vmatpush1.bf16.msra.mxu0 0
        %1273 = vmatprep.subr.bf16.mxu0 0
        %1274 = vmatpush1.bf16.msra.mxu0 0
        %1275 = vmatprep.subr.bf16.mxu0 0
        %1276 = vmatpush1.bf16.msra.mxu0 0
        %1277 = vmatprep.subr.bf16.mxu0 0
        %1278 = vmatpush1.bf16.msra.mxu0 0
        %1279 = vmatprep.subr.bf16.mxu0 0
        %1280 = vmatpush1.bf16.msra.mxu0 0
        %1281 = vmatprep.subr.bf16.mxu0 0
        %1282 = vmatpush1.bf16.msra.mxu0 0
        %1283 = vmatprep.subr.bf16.mxu0 0
        %1284 = vmatpush1.bf16.msra.mxu0 0
        %1285 = vmatprep.subr.bf16.mxu0 0
        %1286 = vmatpush1.bf16.msra.mxu0 0
        %1287 = vmatprep.subr.bf16.mxu0 0
        %1288 = vmatpush1.bf16.msra.mxu0 0
        %1289 = vmatprep.mubr.bf16.mxu0 0
        %1290 = vmatmul.mubr.bf16.gmra.mrb[0].mxu0 %v1255
        %v1291 = vpop.f32.mrb[0].mxu0
        %v1292 = vadd.f32 0.0, %v1291
        %v1293 = vpop.f32.mrb[0].mxu0
        %v1294 = vpop.f32.mrb[0].mxu0
        %v1295 = vpop.f32.mrb[0].mxu0
        %1296 = vdwg.mxu0
        %v1298 = vrot.slane %v1292, 7
        %v1300 = vadd.f32 %v1163, %v1298
        %v1301 = vxor.u32 %v1300, 2147483648
        %v1302 = vmul.f32 %v1301, 1.442695
        %v1303 = vpow.pop %v1302
        %v1304 = vadd.f32 %v1303, 1.0
        %v1305 = vrcp.pop %v1304
        %v1306 = vmul.f32 1.0, %v1305
        %v1307 = vmul.f32 %v1306, 2.0
        %v1308 = vsub.f32 %v1307, 1.0
        %v1310 = vrot.slane %v1243, 7
        %v1312 = vmul.f32 %v1306, %v1310
        %1314 = vrot.lane.b32.xlu0 %v1308, 64
        %v1315 = vpop.permute.xlu0 %1314
        %v1317 = vmul.f32 %v1306, %v1315
        %1319 = vrot.lane.b32.xlu0 %v1317, 32
        %v1320 = vpop.permute.xlu0 %1319
        %v1322 = vadd.f32 %v1312, %v1320
        %v1323 = vtanh.pop %v1322
        %1325 = vrot.lane.b32.xlu0 %v1323, 64
        %v1326 = vpop.permute.xlu0 %1325
        %v1328 = vmul.f32 %v1306, %v1326
        %v1329 = vpack.c.bf16 %v1328, %v1328
        %v1331 = vshrl.u32 %v1329, 16
        %1333 = vrot.lane.b32.xlu0 %v1331, 32
        %v1334 = vpop.permute.xlu0 %1333
        %v1336 = vsel %vm450, %v1334, 0
        %1338 = vmatprep.subr.bf16.mxu0 0
        %1339 = vmatpush1.bf16.msra.mxu0 %v1180
        %1340 = vmatprep.subr.bf16.mxu0 0
        %1341 = vmatpush1.bf16.msra.mxu0 %v1181
        %1342 = vmatprep.subr.bf16.mxu0 0
        %1343 = vmatpush1.bf16.msra.mxu0 0
        %1344 = vmatprep.subr.bf16.mxu0 0
        %1345 = vmatpush1.bf16.msra.mxu0 0
        %1346 = vmatprep.subr.bf16.mxu0 0
        %1347 = vmatpush1.bf16.msra.mxu0 0
        %1348 = vmatprep.subr.bf16.mxu0 0
        %1349 = vmatpush1.bf16.msra.mxu0 0
        %1350 = vmatprep.subr.bf16.mxu0 0
        %1351 = vmatpush1.bf16.msra.mxu0 0
        %1352 = vmatprep.subr.bf16.mxu0 0
        %1353 = vmatpush1.bf16.msra.mxu0 0
        %1354 = vmatprep.subr.bf16.mxu0 0
        %1355 = vmatpush1.bf16.msra.mxu0 0
        %1356 = vmatprep.subr.bf16.mxu0 0
        %1357 = vmatpush1.bf16.msra.mxu0 0
        %1358 = vmatprep.subr.bf16.mxu0 0
        %1359 = vmatpush1.bf16.msra.mxu0 0
        %1360 = vmatprep.subr.bf16.mxu0 0
        %1361 = vmatpush1.bf16.msra.mxu0 0
        %1362 = vmatprep.subr.bf16.mxu0 0
        %1363 = vmatpush1.bf16.msra.mxu0 0
        %1364 = vmatprep.subr.bf16.mxu0 0
        %1365 = vmatpush1.bf16.msra.mxu0 0
        %1366 = vmatprep.subr.bf16.mxu0 0
        %1367 = vmatpush1.bf16.msra.mxu0 0
        %1368 = vmatprep.subr.bf16.mxu0 0
        %1369 = vmatpush1.bf16.msra.mxu0 0
        %1370 = vmatprep.mubr.bf16.mxu0 0
        %1371 = vmatmul.mubr.bf16.gmra.mrb[0].mxu0 %v1336
        %v1372 = vpop.f32.mrb[0].mxu0
        %v1373 = vadd.f32 0.0, %v1372
        %v1374 = vpop.f32.mrb[0].mxu0
        %v1375 = vpop.f32.mrb[0].mxu0
        %v1376 = vpop.f32.mrb[0].mxu0
        %1377 = vdwg.mxu0
        %v1379 = vrot.slane %v1373, 6
        %v1381 = vadd.f32 %v1163, %v1379
        %v1382 = vxor.u32 %v1381, 2147483648
        %v1383 = vmul.f32 %v1382, 1.442695
        %v1384 = vpow.pop %v1383
        %v1385 = vadd.f32 %v1384, 1.0
        %v1386 = vrcp.pop %v1385
        %v1387 = vmul.f32 1.0, %v1386
        %v1388 = vmul.f32 %v1387, 2.0
        %v1389 = vsub.f32 %v1388, 1.0
        %v1391 = vrot.slane %v1322, 7
        %v1393 = vmul.f32 %v1387, %v1391
        %1395 = vrot.lane.b32.xlu0 %v1389, 64
        %v1396 = vpop.permute.xlu0 %1395
        %v1398 = vmul.f32 %v1387, %v1396
        %1400 = vrot.lane.b32.xlu0 %v1398, 32
        %v1401 = vpop.permute.xlu0 %1400
        %v1403 = vadd.f32 %v1393, %v1401
        %v1404 = vtanh.pop %v1403
        %1406 = vrot.lane.b32.xlu0 %v1404, 64
        %v1407 = vpop.permute.xlu0 %1406
        %v1409 = vmul.f32 %v1387, %v1407
        %v1410 = vpack.c.bf16 %v1409, %v1409
        %v1412 = vrot.slane %v1410, 1
        %1413 = vrot.lane.b32.xlu0 %v1412, 32
        %v1414 = vpop.permute.xlu0 %1413
        %v1416 = vsel %vm450, %v1414, 0
        %1418 = vmatprep.subr.bf16.mxu0 0
        %1419 = vmatpush1.bf16.msra.mxu0 %v1180
        %1420 = vmatprep.subr.bf16.mxu0 0
        %1421 = vmatpush1.bf16.msra.mxu0 %v1181
        %1422 = vmatprep.subr.bf16.mxu0 0
        %1423 = vmatpush1.bf16.msra.mxu0 0
        %1424 = vmatprep.subr.bf16.mxu0 0
        %1425 = vmatpush1.bf16.msra.mxu0 0
        %1426 = vmatprep.subr.bf16.mxu0 0
        %1427 = vmatpush1.bf16.msra.mxu0 0
        %1428 = vmatprep.subr.bf16.mxu0 0
        %1429 = vmatpush1.bf16.msra.mxu0 0
        %1430 = vmatprep.subr.bf16.mxu0 0
        %1431 = vmatpush1.bf16.msra.mxu0 0
        %1432 = vmatprep.subr.bf16.mxu0 0
        %1433 = vmatpush1.bf16.msra.mxu0 0
        %1434 = vmatprep.subr.bf16.mxu0 0
        %1435 = vmatpush1.bf16.msra.mxu0 0
        %1436 = vmatprep.subr.bf16.mxu0 0
        %1437 = vmatpush1.bf16.msra.mxu0 0
        %1438 = vmatprep.subr.bf16.mxu0 0
        %1439 = vmatpush1.bf16.msra.mxu0 0
        %1440 = vmatprep.subr.bf16.mxu0 0
        %1441 = vmatpush1.bf16.msra.mxu0 0
        %1442 = vmatprep.subr.bf16.mxu0 0
        %1443 = vmatpush1.bf16.msra.mxu0 0
        %1444 = vmatprep.subr.bf16.mxu0 0
        %1445 = vmatpush1.bf16.msra.mxu0 0
        %1446 = vmatprep.subr.bf16.mxu0 0
        %1447 = vmatpush1.bf16.msra.mxu0 0
        %1448 = vmatprep.subr.bf16.mxu0 0
        %1449 = vmatpush1.bf16.msra.mxu0 0
        %1450 = vmatprep.mubr.bf16.mxu0 0
        %1451 = vmatmul.mubr.bf16.gmra.mrb[0].mxu0 %v1416
        %v1452 = vpop.f32.mrb[0].mxu0
        %v1453 = vadd.f32 0.0, %v1452
        %v1454 = vpop.f32.mrb[0].mxu0
        %v1455 = vpop.f32.mrb[0].mxu0
        %v1456 = vpop.f32.mrb[0].mxu0
        %1457 = vdwg.mxu0
        %v1459 = vrot.slane %v1453, 5
        %v1461 = vadd.f32 %v1163, %v1459
        %v1462 = vxor.u32 %v1461, 2147483648
        %v1463 = vmul.f32 %v1462, 1.442695
        %v1464 = vpow.pop %v1463
        %v1465 = vadd.f32 %v1464, 1.0
        %v1466 = vrcp.pop %v1465
        %v1467 = vmul.f32 1.0, %v1466
        %v1468 = vmul.f32 %v1467, 2.0
        %v1469 = vsub.f32 %v1468, 1.0
        %v1471 = vrot.slane %v1403, 7
        %v1473 = vmul.f32 %v1467, %v1471
        %1475 = vrot.lane.b32.xlu0 %v1469, 64
        %v1476 = vpop.permute.xlu0 %1475
        %v1478 = vmul.f32 %v1467, %v1476
        %1480 = vrot.lane.b32.xlu0 %v1478, 32
        %v1481 = vpop.permute.xlu0 %1480
        %v1483 = vadd.f32 %v1473, %v1481
        %v1484 = vtanh.pop %v1483
        %1486 = vrot.lane.b32.xlu0 %v1484, 64
        %v1487 = vpop.permute.xlu0 %1486
        %v1489 = vmul.f32 %v1467, %v1487
        %v1490 = vpack.c.bf16 %v1489, %v1489
        %v1492 = vshrl.u32 %v1490, 16
        %v1494 = vrot.slane %v1492, 1
        %1495 = vrot.lane.b32.xlu0 %v1494, 32
        %v1496 = vpop.permute.xlu0 %1495
        %v1498 = vsel %vm450, %v1496, 0
        %1500 = vmatprep.subr.bf16.mxu0 0
        %1501 = vmatpush1.bf16.msra.mxu0 %v1180
        %1502 = vmatprep.subr.bf16.mxu0 0
        %1503 = vmatpush1.bf16.msra.mxu0 %v1181
        %1504 = vmatprep.subr.bf16.mxu0 0
        %1505 = vmatpush1.bf16.msra.mxu0 0
        %1506 = vmatprep.subr.bf16.mxu0 0
        %1507 = vmatpush1.bf16.msra.mxu0 0
        %1508 = vmatprep.subr.bf16.mxu0 0
        %1509 = vmatpush1.bf16.msra.mxu0 0
        %1510 = vmatprep.subr.bf16.mxu0 0
        %1511 = vmatpush1.bf16.msra.mxu0 0
        %1512 = vmatprep.subr.bf16.mxu0 0
        %1513 = vmatpush1.bf16.msra.mxu0 0
        %1514 = vmatprep.subr.bf16.mxu0 0
        %1515 = vmatpush1.bf16.msra.mxu0 0
        %1516 = vmatprep.subr.bf16.mxu0 0
        %1517 = vmatpush1.bf16.msra.mxu0 0
        %1518 = vmatprep.subr.bf16.mxu0 0
        %1519 = vmatpush1.bf16.msra.mxu0 0
        %1520 = vmatprep.subr.bf16.mxu0 0
        %1521 = vmatpush1.bf16.msra.mxu0 0
        %1522 = vmatprep.subr.bf16.mxu0 0
        %1523 = vmatpush1.bf16.msra.mxu0 0
        %1524 = vmatprep.subr.bf16.mxu0 0
        %1525 = vmatpush1.bf16.msra.mxu0 0
        %1526 = vmatprep.subr.bf16.mxu0 0
        %1527 = vmatpush1.bf16.msra.mxu0 0
        %1528 = vmatprep.subr.bf16.mxu0 0
        %1529 = vmatpush1.bf16.msra.mxu0 0
        %1530 = vmatprep.subr.bf16.mxu0 0
        %1531 = vmatpush1.bf16.msra.mxu0 0
        %1532 = vmatprep.mubr.bf16.mxu0 0
        %1533 = vmatmul.mubr.bf16.gmra.mrb[0].mxu0 %v1498
        %v1534 = vpop.f32.mrb[0].mxu0
        %v1535 = vadd.f32 0.0, %v1534
        %v1536 = vpop.f32.mrb[0].mxu0
        %v1537 = vpop.f32.mrb[0].mxu0
        %v1538 = vpop.f32.mrb[0].mxu0
        %1539 = vdwg.mxu0
        %v1541 = vrot.slane %v1535, 4
        %v1543 = vadd.f32 %v1163, %v1541
        %v1544 = vxor.u32 %v1543, 2147483648
        %v1545 = vmul.f32 %v1544, 1.442695
        %v1546 = vpow.pop %v1545
        %v1547 = vadd.f32 %v1546, 1.0
        %v1548 = vrcp.pop %v1547
        %v1549 = vmul.f32 1.0, %v1548
        %v1550 = vmul.f32 %v1549, 2.0
        %v1551 = vsub.f32 %v1550, 1.0
        %v1553 = vrot.slane %v1483, 7
        %v1555 = vmul.f32 %v1549, %v1553
        %1557 = vrot.lane.b32.xlu0 %v1551, 64
        %v1558 = vpop.permute.xlu0 %1557
        %v1560 = vmul.f32 %v1549, %v1558
        %1562 = vrot.lane.b32.xlu0 %v1560, 32
        %v1563 = vpop.permute.xlu0 %1562
        %v1565 = vadd.f32 %v1555, %v1563
        %v1566 = vtanh.pop %v1565
        %1568 = vrot.lane.b32.xlu0 %v1566, 64
        %v1569 = vpop.permute.xlu0 %1568
        %v1571 = vmul.f32 %v1549, %v1569
        %v1572 = vpack.c.bf16 %v1571, %v1571
        %v1574 = vrot.slane %v1572, 2
        %1575 = vrot.lane.b32.xlu0 %v1574, 32
        %v1576 = vpop.permute.xlu0 %1575
        %v1578 = vsel %vm450, %v1576, 0
        %1580 = vmatprep.subr.bf16.mxu0 0
        %1581 = vmatpush1.bf16.msra.mxu0 %v1180
        %1582 = vmatprep.subr.bf16.mxu0 0
        %1583 = vmatpush1.bf16.msra.mxu0 %v1181
        %1584 = vmatprep.subr.bf16.mxu0 0
        %1585 = vmatpush1.bf16.msra.mxu0 0
        %1586 = vmatprep.subr.bf16.mxu0 0
        %1587 = vmatpush1.bf16.msra.mxu0 0
        %1588 = vmatprep.subr.bf16.mxu0 0
        %1589 = vmatpush1.bf16.msra.mxu0 0
        %1590 = vmatprep.subr.bf16.mxu0 0
        %1591 = vmatpush1.bf16.msra.mxu0 0
        %1592 = vmatprep.subr.bf16.mxu0 0
        %1593 = vmatpush1.bf16.msra.mxu0 0
        %1594 = vmatprep.subr.bf16.mxu0 0
        %1595 = vmatpush1.bf16.msra.mxu0 0
        %1596 = vmatprep.subr.bf16.mxu0 0
        %1597 = vmatpush1.bf16.msra.mxu0 0
        %1598 = vmatprep.subr.bf16.mxu0 0
        %1599 = vmatpush1.bf16.msra.mxu0 0
        %1600 = vmatprep.subr.bf16.mxu0 0
        %1601 = vmatpush1.bf16.msra.mxu0 0
        %1602 = vmatprep.subr.bf16.mxu0 0
        %1603 = vmatpush1.bf16.msra.mxu0 0
        %1604 = vmatprep.subr.bf16.mxu0 0
        %1605 = vmatpush1.bf16.msra.mxu0 0
        %1606 = vmatprep.subr.bf16.mxu0 0
        %1607 = vmatpush1.bf16.msra.mxu0 0
        %1608 = vmatprep.subr.bf16.mxu0 0
        %1609 = vmatpush1.bf16.msra.mxu0 0
        %1610 = vmatprep.subr.bf16.mxu0 0
        %1611 = vmatpush1.bf16.msra.mxu0 0
        %1612 = vmatprep.mubr.bf16.mxu0 0
        %1613 = vmatmul.mubr.bf16.gmra.mrb[0].mxu0 %v1578
        %v1614 = vpop.f32.mrb[0].mxu0
        %v1615 = vadd.f32 0.0, %v1614
        %v1616 = vpop.f32.mrb[0].mxu0
        %v1617 = vpop.f32.mrb[0].mxu0
        %v1618 = vpop.f32.mrb[0].mxu0
        %1619 = vdwg.mxu0
        %v1621 = vrot.slane %v1615, 3
        %v1623 = vadd.f32 %v1163, %v1621
        %v1624 = vxor.u32 %v1623, 2147483648
        %v1625 = vmul.f32 %v1624, 1.442695
        %v1626 = vpow.pop %v1625
        %v1627 = vadd.f32 %v1626, 1.0
        %v1628 = vrcp.pop %v1627
        %v1629 = vmul.f32 1.0, %v1628
        %v1630 = vmul.f32 %v1629, 2.0
        %v1631 = vsub.f32 %v1630, 1.0
        %v1633 = vrot.slane %v1565, 7
        %v1635 = vmul.f32 %v1629, %v1633
        %1637 = vrot.lane.b32.xlu0 %v1631, 64
        %v1638 = vpop.permute.xlu0 %1637
        %v1640 = vmul.f32 %v1629, %v1638
        %1642 = vrot.lane.b32.xlu0 %v1640, 32
        %v1643 = vpop.permute.xlu0 %1642
        %v1645 = vadd.f32 %v1635, %v1643
        %v1646 = vtanh.pop %v1645
        %1648 = vrot.lane.b32.xlu0 %v1646, 64
        %v1649 = vpop.permute.xlu0 %1648
        %v1651 = vmul.f32 %v1629, %v1649
        %v1652 = vpack.c.bf16 %v1651, %v1651
        %v1654 = vshrl.u32 %v1652, 16
        %v1656 = vrot.slane %v1654, 2
        %1657 = vrot.lane.b32.xlu0 %v1656, 32
        %v1658 = vpop.permute.xlu0 %1657
        %v1660 = vsel %vm450, %v1658, 0
        %1662 = vmatprep.subr.bf16.mxu0 0
        %1663 = vmatpush1.bf16.msra.mxu0 %v1180
        %1664 = vmatprep.subr.bf16.mxu0 0
        %1665 = vmatpush1.bf16.msra.mxu0 %v1181
        %1666 = vmatprep.subr.bf16.mxu0 0
        %1667 = vmatpush1.bf16.msra.mxu0 0
        %1668 = vmatprep.subr.bf16.mxu0 0
        %1669 = vmatpush1.bf16.msra.mxu0 0
        %1670 = vmatprep.subr.bf16.mxu0 0
        %1671 = vmatpush1.bf16.msra.mxu0 0
        %1672 = vmatprep.subr.bf16.mxu0 0
        %1673 = vmatpush1.bf16.msra.mxu0 0
        %1674 = vmatprep.subr.bf16.mxu0 0
        %1675 = vmatpush1.bf16.msra.mxu0 0
        %1676 = vmatprep.subr.bf16.mxu0 0
        %1677 = vmatpush1.bf16.msra.mxu0 0
        %1678 = vmatprep.subr.bf16.mxu0 0
        %1679 = vmatpush1.bf16.msra.mxu0 0
        %1680 = vmatprep.subr.bf16.mxu0 0
        %1681 = vmatpush1.bf16.msra.mxu0 0
        %1682 = vmatprep.subr.bf16.mxu0 0
        %1683 = vmatpush1.bf16.msra.mxu0 0
        %1684 = vmatprep.subr.bf16.mxu0 0
        %1685 = vmatpush1.bf16.msra.mxu0 0
        %1686 = vmatprep.subr.bf16.mxu0 0
        %1687 = vmatpush1.bf16.msra.mxu0 0
        %1688 = vmatprep.subr.bf16.mxu0 0
        %1689 = vmatpush1.bf16.msra.mxu0 0
        %1690 = vmatprep.subr.bf16.mxu0 0
        %1691 = vmatpush1.bf16.msra.mxu0 0
        %1692 = vmatprep.subr.bf16.mxu0 0
        %1693 = vmatpush1.bf16.msra.mxu0 0
        %1694 = vmatprep.mubr.bf16.mxu0 0
        %1695 = vmatmul.mubr.bf16.gmra.mrb[0].mxu0 %v1660
        %v1696 = vpop.f32.mrb[0].mxu0
        %v1697 = vadd.f32 0.0, %v1696
        %v1698 = vpop.f32.mrb[0].mxu0
        %v1699 = vpop.f32.mrb[0].mxu0
        %v1700 = vpop.f32.mrb[0].mxu0
        %1701 = vdwg.mxu0
        %v1703 = vrot.slane %v1697, 2
        %v1705 = vadd.f32 %v1163, %v1703
        %v1706 = vxor.u32 %v1705, 2147483648
        %v1707 = vmul.f32 %v1706, 1.442695
        %v1708 = vpow.pop %v1707
        %v1709 = vadd.f32 %v1708, 1.0
        %v1710 = vrcp.pop %v1709
        %v1711 = vmul.f32 1.0, %v1710
        %v1712 = vmul.f32 %v1711, 2.0
        %v1713 = vsub.f32 %v1712, 1.0
        %v1715 = vrot.slane %v1645, 7
        %v1717 = vmul.f32 %v1711, %v1715
        %1719 = vrot.lane.b32.xlu0 %v1713, 64
        %v1720 = vpop.permute.xlu0 %1719
        %v1722 = vmul.f32 %v1711, %v1720
        %1724 = vrot.lane.b32.xlu0 %v1722, 32
        %v1725 = vpop.permute.xlu0 %1724
        %v1727 = vadd.f32 %v1717, %v1725
        %v1728 = vtanh.pop %v1727
        %1730 = vrot.lane.b32.xlu0 %v1728, 64
        %v1731 = vpop.permute.xlu0 %1730
        %v1733 = vmul.f32 %v1711, %v1731
        %v1734 = vpack.c.bf16 %v1733, %v1733
        %v1736 = vrot.slane %v1734, 3
        %1737 = vrot.lane.b32.xlu0 %v1736, 32
        %v1738 = vpop.permute.xlu0 %1737
        %v1740 = vsel %vm450, %v1738, 0
        %1742 = vmatprep.subr.bf16.mxu0 0
        %1743 = vmatpush1.bf16.msra.mxu0 %v1180
        %1744 = vmatprep.subr.bf16.mxu0 0
        %1745 = vmatpush1.bf16.msra.mxu0 %v1181
        %1746 = vmatprep.subr.bf16.mxu0 0
        %1747 = vmatpush1.bf16.msra.mxu0 0
        %1748 = vmatprep.subr.bf16.mxu0 0
        %1749 = vmatpush1.bf16.msra.mxu0 0
        %1750 = vmatprep.subr.bf16.mxu0 0
        %1751 = vmatpush1.bf16.msra.mxu0 0
        %1752 = vmatprep.subr.bf16.mxu0 0
        %1753 = vmatpush1.bf16.msra.mxu0 0
        %1754 = vmatprep.subr.bf16.mxu0 0
        %1755 = vmatpush1.bf16.msra.mxu0 0
        %1756 = vmatprep.subr.bf16.mxu0 0
        %1757 = vmatpush1.bf16.msra.mxu0 0
        %1758 = vmatprep.subr.bf16.mxu0 0
        %1759 = vmatpush1.bf16.msra.mxu0 0
        %1760 = vmatprep.subr.bf16.mxu0 0
        %1761 = vmatpush1.bf16.msra.mxu0 0
        %1762 = vmatprep.subr.bf16.mxu0 0
        %1763 = vmatpush1.bf16.msra.mxu0 0
        %1764 = vmatprep.subr.bf16.mxu0 0
        %1765 = vmatpush1.bf16.msra.mxu0 0
        %1766 = vmatprep.subr.bf16.mxu0 0
        %1767 = vmatpush1.bf16.msra.mxu0 0
        %1768 = vmatprep.subr.bf16.mxu0 0
        %1769 = vmatpush1.bf16.msra.mxu0 0
        %1770 = vmatprep.subr.bf16.mxu0 0
        %1771 = vmatpush1.bf16.msra.mxu0 0
        %1772 = vmatprep.subr.bf16.mxu0 0
        %1773 = vmatpush1.bf16.msra.mxu0 0
        %1774 = vmatprep.mubr.bf16.mxu0 0
        %1775 = vmatmul.mubr.bf16.gmra.mrb[0].mxu0 %v1740
        %v1776 = vpop.f32.mrb[0].mxu0
        %v1777 = vadd.f32 0.0, %v1776
        %v1778 = vpop.f32.mrb[0].mxu0
        %v1779 = vpop.f32.mrb[0].mxu0
        %v1780 = vpop.f32.mrb[0].mxu0
        %1781 = vdwg.mxu0
        %v1783 = vrot.slane %v1777, 1
        %v1785 = vadd.f32 %v1163, %v1783
        %v1786 = vxor.u32 %v1785, 2147483648
        %v1787 = vmul.f32 %v1786, 1.442695
        %v1788 = vpow.pop %v1787
        %v1789 = vadd.f32 %v1788, 1.0
        %v1790 = vrcp.pop %v1789
        %v1791 = vmul.f32 1.0, %v1790
        %v1792 = vmul.f32 %v1791, 2.0
        %v1793 = vsub.f32 %v1792, 1.0
        %v1795 = vrot.slane %v1727, 7
        %v1797 = vmul.f32 %v1791, %v1795
        %1799 = vrot.lane.b32.xlu0 %v1793, 64
        %v1800 = vpop.permute.xlu0 %1799
        %v1802 = vmul.f32 %v1791, %v1800
        %1804 = vrot.lane.b32.xlu0 %v1802, 32
        %v1805 = vpop.permute.xlu0 %1804
        %v1807 = vadd.f32 %v1797, %v1805
        %v1808 = vtanh.pop %v1807
        %1810 = vrot.lane.b32.xlu0 %v1808, 64
        %v1811 = vpop.permute.xlu0 %1810
        %v1813 = vmul.f32 %v1791, %v1811
        %v1814 = vsel %vm1084, %v1249, %v1328
        %v1815 = vsel %vm1086, %v1814, %v1409
        %v1816 = vsel %vm1088, %v1815, %v1489
        %v1817 = vsel %vm1090, %v1816, %v1571
        %v1818 = vsel %vm1092, %v1817, %v1651
        %v1819 = vsel %vm1094, %v1818, %v1733
        %v1820 = vsel %vm1096, %v1819, %v1813
        %v1821 = vtanh.pop %v1820
        %v1822 = vpack.c.bf16 %v1821, %v1821
        %v1823 = vld [vmem:[%s7] sm:$0xf]
        %v1824 = vld [vmem:[%s7 + $0x4] sm:$0xf]
        %v1825 = vld [vmem:[%s7 + $0x8] sm:$0xf]
        %v1826 = vld [vmem:[%s7 + $0xc] sm:$0xf]
        %v1827 = vld [vmem:[%s8] sm:$0x1]
        %v1829 = vlaneseq
        %v1830 = vshrl.u32 %v1829, 7
        %v1831 = vsub.s32 0, %v1830
        %v1832 = vrot.slane %v1827, %v1831
        %1835 = vrot.lane.b32.xlu0 %v1822, 32
        %v1836 = vpop.permute.xlu0 %1835
        %v1841 = vunpack.c.l.b16 %v1823
        %v1842 = vunpack.c.l.b16 %v1824
        %v1843 = vunpack.c.l.b16 %v1825
        %v1844 = vunpack.c.l.b16 %v1826
        %v1845 = vpack.c.b16 %v1842, %v1841
        %v1846 = vpack.c.b16 %v1844, %v1843
        %v1850 = vsel %vm450, %v1836, 0
        %1852 = vmatprep.subr.bf16.mxu0 0
        %1853 = vmatpush1.bf16.msra.mxu0 %v1845
        %1854 = vmatprep.subr.bf16.mxu0 0
        %1855 = vmatpush1.bf16.msra.mxu0 %v1846
        %1856 = vmatprep.subr.bf16.mxu0 0
        %1857 = vmatpush1.bf16.msra.mxu0 0
        %1858 = vmatprep.subr.bf16.mxu0 0
        %1859 = vmatpush1.bf16.msra.mxu0 0
        %1860 = vmatprep.subr.bf16.mxu0 0
        %1861 = vmatpush1.bf16.msra.mxu0 0
        %1862 = vmatprep.subr.bf16.mxu0 0
        %1863 = vmatpush1.bf16.msra.mxu0 0
        %1864 = vmatprep.subr.bf16.mxu0 0
        %1865 = vmatpush1.bf16.msra.mxu0 0
        %1866 = vmatprep.subr.bf16.mxu0 0
        %1867 = vmatpush1.bf16.msra.mxu0 0
        %1868 = vmatprep.subr.bf16.mxu0 0
        %1869 = vmatpush1.bf16.msra.mxu0 0
        %1870 = vmatprep.subr.bf16.mxu0 0
        %1871 = vmatpush1.bf16.msra.mxu0 0
        %1872 = vmatprep.subr.bf16.mxu0 0
        %1873 = vmatpush1.bf16.msra.mxu0 0
        %1874 = vmatprep.subr.bf16.mxu0 0
        %1875 = vmatpush1.bf16.msra.mxu0 0
        %1876 = vmatprep.subr.bf16.mxu0 0
        %1877 = vmatpush1.bf16.msra.mxu0 0
        %1878 = vmatprep.subr.bf16.mxu0 0
        %1879 = vmatpush1.bf16.msra.mxu0 0
        %1880 = vmatprep.subr.bf16.mxu0 0
        %1881 = vmatpush1.bf16.msra.mxu0 0
        %1882 = vmatprep.subr.bf16.mxu0 0
        %1883 = vmatpush1.bf16.msra.mxu0 0
        %1884 = vmatprep.mubr.bf16.mxu0 0
        %1885 = vmatmul.mubr.bf16.gmra.mrb[0].mxu0 %v1850
        %v1886 = vpop.f32.mrb[0].mxu0
        %v1887 = vadd.f32 %v1832, %v1886
        %v1888 = vpop.f32.mrb[0].mxu0
        %v1889 = vpop.f32.mrb[0].mxu0
        %v1890 = vpop.f32.mrb[0].mxu0
        %1891 = vdwg.mxu0
        %vm1892 = vcmask 39936
        %1893 = vst.msk [vmem:[%s371] sm:$0xff] %vm1892, %v1887
        %p1894 = scmp.lt.s32.totalorder %s22, 1
        %s1895 = scalar_select %p1894, %s22, 1
        %s1896 = smul.addr %s1895, 8
        %s1897 = scalar_lea.vmem %s9, %s1896
        // Predicated region
        $region69: #{tpu_custom_call.1} parent=55 // pred_check
          %p1898 = pneg %p234
        $region70: #{tpu_custom_call.1} parent=55 // pred_check_branch
          %1900 = sbr.rel (%p1898) target = $region72
        $region71: #{tpu_custom_call.1} parent=55 // pred_region
          _
        $region72: #{tpu_custom_call.1} parent=55 // pred_fallthru
          _
      $region56: #{tpu_custom_call.1} parent=5 // pred_fallthru
        _
      %p1901 = scmp.le.s32.totalorder 2, %s17
      // Predicated region
      $region73: #{tpu_custom_call.1} parent=5 // pred_check
        %p1902 = pneg %p1901
      $region74: #{tpu_custom_call.1} parent=5 // pred_check_branch
        %1904 = sbr.rel (%p1902) target = $region76
      $region75: #{tpu_custom_call.1} parent=5 // pred_region
        %s1905 = ssub.s32 %s17, 2
        // Predicated region
        $region77: #{tpu_custom_call.1} parent=75 // pred_check
          %p1906 = pneg %p240
        $region78: #{tpu_custom_call.1} parent=75 // pred_check_branch
          %1908 = sbr.rel (%p1906) target = $region80
        $region79: #{tpu_custom_call.1} parent=75 // pred_region
          %p1909 = scmp.lt.s32.totalorder %s23, 1
          %s1910 = scalar_select %p1909, %s23, 1
          %s1911 = smul.addr %s1910, 8
          %s1912 = scalar_lea.vmem %s9, %s1911
        $region80: #{tpu_custom_call.1} parent=75 // pred_fallthru
          _
      $region76: #{tpu_custom_call.1} parent=5 // pred_fallthru
        _
    $region6: #{tpu_custom_call.1} parent=1 // loop_footer
      %s21 = sadd.s32 1, %s17
    $region7: #{tpu_custom_call.1} parent=1 // loop_footer_branch
      %16 = sbr.rel target = $region3
    $region8: #{tpu_custom_call.1} parent=1 // loop_exit
      _
    %1913 = vsyncpa [#allocation3], 1
    %s1914 = scalar_lea.sflag [#allocation3], 1
    %1915 = vsyncpa %s1914, 1
    %1916 = vsyncpa [#allocation5], 1

</llo_original>
